<compile_context>
chip_gen: v7x
topology: tpu7x:2x2x1
jax: 0.10.0
libtpu: 0.0.40
codegen_flags: <defaults>
</compile_context>

<pallas_src>
import functools

import jax
import jax.numpy as jnp
from jax.experimental import pallas as pl
from jax.experimental.pallas import tpu as pltpu


def _row_bcast(ref, row, rows, via_load):
    """(rows, last_dim) broadcast of ref[row, :]."""
    if via_load:
        # Stride-0 sublane-broadcast load: broadcast happens on the vld slot.
        return ref[pl.ds(row, rows, stride=0), :]
    return jnp.broadcast_to(ref[row:row + 1, :], (rows, ref.shape[-1]))


def _peg_kernel(xin_ref, w_ref, b_ref, o_ref, ring_ref, *,
                H, WD, D, F, fwd, TH, fast):
    """One grid step = one incoming frame of one batch element.

    xin_ref  : (H, WD)        incoming frame f (clamped to F-1 at the tail)
    w_ref    : (27, WD) f32   per-tap weights, W-edge zero padding folded in
    b_ref    : (1, WD)  f32   bias broadcast over W
    o_ref    : (H, WD)        output frame f - fwd
    ring_ref : (3, H+2, WD)   carried frame ring; rows 0 and H+1 are zero halo
    """
    f = pl.program_id(1)

    # New batch element: reset the ring (zero halo rows + zero "pre-history").
    @pl.when(f == 0)
    def _():
        ring_ref[...] = jnp.zeros_like(ring_ref)

    # Slot rotation: the frame received at step f lives in slot f % 3.
    slot_new = f % 3            # frame f      -> kf = 2 tap
    slot_ctr = (f + 2) % 3      # frame f - 1  -> kf = 1 tap
    slot_old = (f + 1) % 3      # frame f - 2  -> kf = 0 tap

    # Stash the incoming frame into rows 1..H of its haloed ring slot.  The
    # clamped re-fetch past the end of the sequence is scaled to zero so it
    # contributes nothing when read back as the kf = 2 tap.
    xin = xin_ref[...]
    if fwd > 0:
        xin = xin * (f < F).astype(xin.dtype)
    ring_ref[slot_new, pl.ds(1, H), :] = xin

    def compute():
        slots = (slot_old, slot_ctr, slot_new)          # kf = 0, 1, 2
        for r0 in range(0, H, TH):
            th = min(TH, H - r0)
            # Chunk accumulator initialized with the bias (row broadcast).
            acc = _row_bcast(b_ref, 0, th, fast)
            for kf in range(3):
                src = ring_ref.at[slots[kf]]
                for kh in range(3):
                    # Output rows [r0, r0+th) read haloed ring rows
                    # [r0+kh, r0+kh+th)  (== padded-H rows, halo is zero).
                    chunk = src[pl.ds(r0 + kh, th), :].astype(jnp.float32)
                    for kw in range(3):
                        t = kw - 1                       # W shift in lanes
                        shifted = chunk if t == 0 else pltpu.roll(
                            chunk, shift=(-t * D) % WD, axis=1)
                        tap = kf * 9 + kh * 3 + kw
                        w_b = _row_bcast(w_ref, tap, th, fast)
                        acc = acc + shifted * w_b
            o_ref[pl.ds(r0, th), :] = acc.astype(o_ref.dtype)

    if fwd > 0:
        pl.when(f >= fwd)(compute)   # first `fwd` steps only prime the ring
    else:
        compute()


def peg_forward(x, weight, bias, shape=None, causal=False):
    """JAX/Pallas equivalent of PEG.forward.

    x      : (b, f, h, w, d)  or  (b, n, d) with `shape=(b, f, h, w)` given
    weight : (d, 1, 3, 3, 3)  (PyTorch Conv3d depthwise weight layout)
    bias   : (d,)
    """
    needs_shape = x.ndim == 3
    assert not (needs_shape and shape is None)
    orig_shape = x.shape
    if needs_shape:
        x = x.reshape(*shape, -1)

    B, F, H, W, D = x.shape
    WD = W * D
    x_m = x.reshape(B, F, H, WD)

    # Tap-major depthwise weights, broadcast along W, W-boundary zero padding
    # folded in (kw=0 tap is 0 at w=0, kw=2 tap is 0 at w=W-1).
    w_taps = jnp.transpose(weight[:, 0], (1, 2, 3, 0)).reshape(27, D)
    w_taps = w_taps.astype(jnp.float32)
    w_bcast = jnp.broadcast_to(w_taps[:, None, :], (27, W, D))
    wpos = jnp.arange(W)
    kw_idx = jnp.arange(27) % 3
    wmask = jnp.where(kw_idx[:, None] == 0, wpos[None, :] > 0,
                      jnp.where(kw_idx[:, None] == 2, wpos[None, :] < W - 1,
                                True))
    w_m = (w_bcast * wmask[:, :, None].astype(jnp.float32)).reshape(27, WD)
    b_m = jnp.broadcast_to(bias.astype(jnp.float32)[None, :],
                           (W, D)).reshape(1, WD)

    # Number of look-ahead frames (max positive frame offset of the 3x3x3 tap).
    fwd = 0 if causal else 1

    # H chunk size: keep the f32 accumulator chunk <= ~32 KiB (vreg-resident),
    # in multiples of the 8-row sublane tile.
    rows = (32 * 1024) // (4 * WD)
    TH = int(min(H, max(8, (rows // 8) * 8)))

    itemsize = x_m.dtype.itemsize
    flops = 2 * 27 * B * F * H * W * D
    # Single-stream: x read once, output written once, constants once.
    bytes_accessed = 2 * x_m.size * itemsize + (w_m.size + b_m.size) * 4

    # VMEM footprint: incoming (x2 bufs) + output (x2 bufs) + 3-slot haloed
    # ring + (single-buffered) weights + bias.  Never request more than 48 MiB
    # (v7x has 64 MiB / TensorCore), never less than the 32 MiB default.
    frame_bytes = H * WD * itemsize
    vmem_needed = (4 * frame_bytes + 3 * (H + 2) * WD * itemsize
                   + (w_m.size + b_m.size) * 4)
    vmem_limit = int(min(max(2 * vmem_needed, 32 * 1024 * 1024),
                         48 * 1024 * 1024))

    def run(fast):
        kernel = functools.partial(_peg_kernel, H=H, WD=WD, D=D, F=F,
                                   fwd=fwd, TH=TH, fast=fast)

        frame_spec = pl.BlockSpec(
            (pl.Squeezed(), pl.Squeezed(), H, WD),
            lambda b, f: (b, jnp.minimum(f, F - 1), 0, 0))
        out_spec = pl.BlockSpec(
            (pl.Squeezed(), pl.Squeezed(), H, WD),
            lambda b, f: (b, jnp.maximum(f - fwd, 0), 0, 0))

        def const_spec(shape):
            if fast:
                return pl.BlockSpec(shape, lambda b, f: (0,) * len(shape),
                                    pipeline_mode=pl.Buffered(1))
            return pl.BlockSpec(shape, lambda b, f: (0,) * len(shape))

        return pl.pallas_call(
            kernel,
            out_shape=jax.ShapeDtypeStruct((B, F, H, WD), x.dtype),
            grid_spec=pltpu.PrefetchScalarGridSpec(
                num_scalar_prefetch=0,
                grid=(B, F + fwd),
                in_specs=[
                    frame_spec,
                    const_spec((27, WD)),
                    const_spec((1, WD)),
                ],
                out_specs=out_spec,
                scratch_shapes=[pltpu.VMEM((3, H + 2, WD), x_m.dtype)],
            ),
            compiler_params=pltpu.CompilerParams(
                dimension_semantics=("parallel", "arbitrary"),
                vmem_limit_bytes=vmem_limit),
            cost_estimate=pl.CostEstimate(flops=flops, transcendentals=0,
                                          bytes_accessed=bytes_accessed),
        )(x_m, w_m, b_m)

    try:
        out = run(fast=True)
    except Exception:
        # Fallback if this jax build rejects stride-0 broadcast loads or
        # pl.Buffered(1): same kernel, jnp broadcasts + default buffering.
        out = run(fast=False)

    out = out.reshape(B, F, H, W, D)
    return out.reshape(orig_shape)


def _reference_peg(x, weight, bias, causal=False):
    """Pure-JAX reference (shift-and-sum depthwise conv) for validation."""
    B, F, H, W, D = x.shape
    frame_pad = (2, 0) if causal else (1, 1)
    xp = jnp.pad(x, ((0, 0), frame_pad, (1, 1), (1, 1), (0, 0)))
    out = jnp.zeros((B, F, H, W, D), dtype=jnp.float32)
    for kf in range(3):
        for kh in range(3):
            for kw in range(3):
                win = xp[:, kf:kf + F, kh:kh + H, kw:kw + W, :]
                wtap = weight[:, 0, kf, kh, kw]  # (D,)
                out = out + win.astype(jnp.float32) * wtap.astype(jnp.float32)
    return (out + bias.astype(jnp.float32)).astype(x.dtype)


if __name__ == "__main__":
    key = jax.random.PRNGKey(0)
    k_x, k_w, k_b = jax.random.split(key, 3)

    # Small demo shapes; W*D = 128 so the merged last dim is exactly lane-dense.
    B, F, H, W, D = 2, 4, 8, 8, 16

    x = jax.random.normal(k_x, (B, F, H, W, D), dtype=jnp.float32)
    fan_in = 1 * 3 * 3 * 3
    bound = 1.0 / (fan_in ** 0.5)
    weight = jax.random.uniform(k_w, (D, 1, 3, 3, 3), minval=-bound,
                                maxval=bound, dtype=jnp.float32)
    bias = jax.random.uniform(k_b, (D,), minval=-bound, maxval=bound,
                              dtype=jnp.float32)

    # Non-causal path.
    out = jax.block_until_ready(peg_forward(x, weight, bias, causal=False))
    ref = _reference_peg(x, weight, bias, causal=False)
    assert out.shape == x.shape
    assert jnp.allclose(out, ref, atol=1e-4, rtol=1e-4), "mismatch (non-causal)"

    # Causal path.
    out_c = jax.block_until_ready(peg_forward(x, weight, bias, causal=True))
    ref_c = _reference_peg(x, weight, bias, causal=True)
    assert jnp.allclose(out_c, ref_c, atol=1e-4, rtol=1e-4), "mismatch (causal)"

    # (b, n, d) + shape path, same semantics.
    x_flat = x.reshape(B, F * H * W, D)
    out_flat = jax.block_until_ready(
        peg_forward(x_flat, weight, bias, shape=(B, F, H, W), causal=False))
    assert out_flat.shape == x_flat.shape
    assert jnp.allclose(out_flat.reshape(B, F, H, W, D), ref,
                        atol=1e-4, rtol=1e-4), "mismatch (flat path)"

    print("KERNEL_OK")
</pallas_src>

<mosaic_0001>
module attributes {stable_mosaic.version = 11 : i64} {
  func.func @_peg_kernel(%arg0: i32, %arg1: i32, %arg2: memref<1x1x8x128xf32, #tpu.memory_space<vmem>>, %arg3: memref<27x128xf32, #tpu.memory_space<vmem>>, %arg4: memref<1x128xf32, #tpu.memory_space<vmem>>, %arg5: memref<1x1x8x128xf32, #tpu.memory_space<vmem>>, %arg6: memref<3x10x128xf32, #tpu.memory_space<vmem>>) attributes {dimension_semantics = [#tpu.dimension_semantics<parallel>, #tpu.dimension_semantics<arbitrary>], iteration_bounds = array<i64: 2, 5>, scalar_prefetch = 0 : i64, scratch_operands = 1 : i64, tpu.core_type = #tpu.core_type<tc>, window_params = [{transform_indices = @transform_0, window_bounds = array<i64: 1, 1, 8, 128>}, {pipeline_mode = #tpu.pipeline_mode<synchronous>, transform_indices = @transform_1, window_bounds = array<i64: 27, 128>}, {pipeline_mode = #tpu.pipeline_mode<synchronous>, transform_indices = @transform_2, window_bounds = array<i64: 1, 128>}, {transform_indices = @transform_3, window_bounds = array<i64: 1, 1, 8, 128>}]} {
    %c0_i32 = arith.constant 0 : i32
    %0 = arith.cmpi eq, %arg1, %c0_i32 : i32
    %1 = arith.extui %0 : i1 to i32
    %c0_i32_0 = arith.constant 0 : i32
    %2 = arith.cmpi ne, %1, %c0_i32_0 : i32
    scf.if %2 {
      %cst = arith.constant 0.000000e+00 : f32
      %49 = vector.broadcast %cst : f32 to vector<3x10x128xf32>
      %c0_24 = arith.constant 0 : index
      %c0_25 = arith.constant 0 : index
      %c0_26 = arith.constant 0 : index
      %50 = vector.load %arg6[%c0_24, %c0_25, %c0_26] : memref<3x10x128xf32, #tpu.memory_space<vmem>>, vector<3x10x128xf32>
      tpu.vector_store %arg6[%c0_24, %c0_25, %c0_26], %49 {strides = array<i32>} : memref<3x10x128xf32, #tpu.memory_space<vmem>>, vector<3x10x128xf32>,
    } else {
    }
    %c3_i32 = arith.constant 3 : i32
    %c0_i32_1 = arith.constant 0 : i32
    %3 = arith.cmpi eq, %c3_i32, %c0_i32_1 : i32
    %c1_i32 = arith.constant 1 : i32
    %4 = arith.select %3, %c1_i32, %c3_i32 : i32
    %5 = arith.remsi %arg1, %4 : i32
    %c0_i32_2 = arith.constant 0 : i32
    %6 = arith.cmpi ne, %5, %c0_i32_2 : i32
    %c0_i32_3 = arith.constant 0 : i32
    %7 = arith.cmpi slt, %5, %c0_i32_3 : i32
    %c0_i32_4 = arith.constant 0 : i32
    %8 = arith.cmpi slt, %4, %c0_i32_4 : i32
    %9 = arith.xori %7, %8 : i1
    %10 = arith.andi %9, %6 : i1
    %11 = arith.addi %5, %4 : i32
    %12 = arith.select %10, %11, %5 : i32
    %c2_i32 = arith.constant 2 : i32
    %13 = arith.addi %arg1, %c2_i32 : i32
    %c3_i32_5 = arith.constant 3 : i32
    %c0_i32_6 = arith.constant 0 : i32
    %14 = arith.cmpi eq, %c3_i32_5, %c0_i32_6 : i32
    %c1_i32_7 = arith.constant 1 : i32
    %15 = arith.select %14, %c1_i32_7, %c3_i32_5 : i32
    %16 = arith.remsi %13, %15 : i32
    %c0_i32_8 = arith.constant 0 : i32
    %17 = arith.cmpi ne, %16, %c0_i32_8 : i32
    %c0_i32_9 = arith.constant 0 : i32
    %18 = arith.cmpi slt, %16, %c0_i32_9 : i32
    %c0_i32_10 = arith.constant 0 : i32
    %19 = arith.cmpi slt, %15, %c0_i32_10 : i32
    %20 = arith.xori %18, %19 : i1
    %21 = arith.andi %20, %17 : i1
    %22 = arith.addi %16, %15 : i32
    %23 = arith.select %21, %22, %16 : i32
    %c1_i32_11 = arith.constant 1 : i32
    %24 = arith.addi %arg1, %c1_i32_11 : i32
    %c3_i32_12 = arith.constant 3 : i32
    %c0_i32_13 = arith.constant 0 : i32
    %25 = arith.cmpi eq, %c3_i32_12, %c0_i32_13 : i32
    %c1_i32_14 = arith.constant 1 : i32
    %26 = arith.select %25, %c1_i32_14, %c3_i32_12 : i32
    %27 = arith.remsi %24, %26 : i32
    %c0_i32_15 = arith.constant 0 : i32
    %28 = arith.cmpi ne, %27, %c0_i32_15 : i32
    %c0_i32_16 = arith.constant 0 : i32
    %29 = arith.cmpi slt, %27, %c0_i32_16 : i32
    %c0_i32_17 = arith.constant 0 : i32
    %30 = arith.cmpi slt, %26, %c0_i32_17 : i32
    %31 = arith.xori %29, %30 : i1
    %32 = arith.andi %31, %28 : i1
    %33 = arith.addi %27, %26 : i32
    %34 = arith.select %32, %33, %27 : i32
    %c0 = arith.constant 0 : index
    %c0_18 = arith.constant 0 : index
    %c0_19 = arith.constant 0 : index
    %c0_20 = arith.constant 0 : index
    %35 = vector.load %arg2[%c0, %c0_18, %c0_19, %c0_20] : memref<1x1x8x128xf32, #tpu.memory_space<vmem>>, vector<1x1x8x128xf32>
    %36 = vector.shape_cast %35 : vector<1x1x8x128xf32> to vector<8x128xf32>
    %c4_i32 = arith.constant 4 : i32
    %37 = arith.cmpi slt, %arg1, %c4_i32 : i32
    %38 = arith.extui %37 : i1 to i32
    %39 = arith.sitofp %38 : i32 to f32
    %40 = vector.broadcast %39 : f32 to vector<8x128xf32>
    %41 = arith.mulf %36, %40 : vector<8x128xf32>
    %42 = arith.index_cast %12 : i32 to index
    %c1 = arith.constant 1 : index
    %c0_21 = arith.constant 0 : index
    %43 = vector.load %arg6[%42, %c1, %c0_21] : memref<3x10x128xf32, #tpu.memory_space<vmem>>, vector<1x8x128xf32>
    %44 = vector.shape_cast %43 : vector<1x8x128xf32> to vector<8x128xf32>
    %45 = vector.shape_cast %41 : vector<8x128xf32> to vector<1x8x128xf32>
    tpu.vector_store %arg6[%42, %c1, %c0_21], %45 {strides = array<i32>} : memref<3x10x128xf32, #tpu.memory_space<vmem>>, vector<1x8x128xf32>,
    %c1_i32_22 = arith.constant 1 : i32
    %46 = arith.cmpi sge, %arg1, %c1_i32_22 : i32
    %47 = arith.extui %46 : i1 to i32
    %c0_i32_23 = arith.constant 0 : i32
    %48 = arith.cmpi ne, %47, %c0_i32_23 : i32
    scf.if %48 {
      %c0_24 = arith.constant 0 : index
      %c0_25 = arith.constant 0 : index
      %49 = tpu.strided_load %arg4[%c0_24, %c0_25] {strides = array<i32: 0, 1>} : memref<1x128xf32, #tpu.memory_space<vmem>>, vector<8x128xf32>
      %c0_i32_26 = arith.constant 0 : i32
      %c0_i32_27 = arith.constant 0 : i32
      %50 = tpu.memref_slice %arg6[%34, %c0_i32_26, %c0_i32_27] : memref<3x10x128xf32, #tpu.memory_space<vmem>> -> memref<1x10x128xf32, #tpu.memory_space<vmem>>
      %51 = tpu.memref_squeeze %50 : memref<1x10x128xf32, #tpu.memory_space<vmem>> -> memref<10x128xf32, #tpu.memory_space<vmem>>
      %c0_28 = arith.constant 0 : index
      %c0_29 = arith.constant 0 : index
      %52 = vector.load %51[%c0_28, %c0_29] : memref<10x128xf32, #tpu.memory_space<vmem>>, vector<8x128xf32>
      %c16_i32 = arith.constant 16 : i32
      %53 = tpu.dynamic_rotate %52 by %c16_i32 dim 1 : vector<8x128xf32>, i32 -> vector<8x128xf32>
      %c0_30 = arith.constant 0 : index
      %c0_31 = arith.constant 0 : index
      %54 = tpu.strided_load %arg3[%c0_30, %c0_31] {strides = array<i32: 0, 1>} : memref<27x128xf32, #tpu.memory_space<vmem>>, vector<8x128xf32>
      %55 = arith.mulf %53, %54 : vector<8x128xf32>
      %56 = arith.addf %49, %55 : vector<8x128xf32>
      %c1_32 = arith.constant 1 : index
      %c0_33 = arith.constant 0 : index
      %57 = tpu.strided_load %arg3[%c1_32, %c0_33] {strides = array<i32: 0, 1>} : memref<27x128xf32, #tpu.memory_space<vmem>>, vector<8x128xf32>
      %58 = arith.mulf %52, %57 : vector<8x128xf32>
      %59 = arith.addf %56, %58 : vector<8x128xf32>
      %c112_i32 = arith.constant 112 : i32
      %60 = tpu.dynamic_rotate %52 by %c112_i32 dim 1 : vector<8x128xf32>, i32 -> vector<8x128xf32>
      %c2 = arith.constant 2 : index
      %c0_34 = arith.constant 0 : index
      %61 = tpu.strided_load %arg3[%c2, %c0_34] {strides = array<i32: 0, 1>} : memref<27x128xf32, #tpu.memory_space<vmem>>, vector<8x128xf32>
      %62 = arith.mulf %60, %61 : vector<8x128xf32>
      %63 = arith.addf %59, %62 : vector<8x128xf32>
      %c0_i32_35 = arith.constant 0 : i32
      %c0_i32_36 = arith.constant 0 : i32
      %64 = tpu.memref_slice %arg6[%34, %c0_i32_35, %c0_i32_36] : memref<3x10x128xf32, #tpu.memory_space<vmem>> -> memref<1x10x128xf32, #tpu.memory_space<vmem>>
      %65 = tpu.memref_squeeze %64 : memref<1x10x128xf32, #tpu.memory_space<vmem>> -> memref<10x128xf32, #tpu.memory_space<vmem>>
      %c1_37 = arith.constant 1 : index
      %c0_38 = arith.constant 0 : index
      %66 = vector.load %65[%c1_37, %c0_38] : memref<10x128xf32, #tpu.memory_space<vmem>>, vector<8x128xf32>
      %c16_i32_39 = arith.constant 16 : i32
      %67 = tpu.dynamic_rotate %66 by %c16_i32_39 dim 1 : vector<8x128xf32>, i32 -> vector<8x128xf32>
      %c3 = arith.constant 3 : index
      %c0_40 = arith.constant 0 : index
      %68 = tpu.strided_load %arg3[%c3, %c0_40] {strides = array<i32: 0, 1>} : memref<27x128xf32, #tpu.memory_space<vmem>>, vector<8x128xf32>
      %69 = arith.mulf %67, %68 : vector<8x128xf32>
      %70 = arith.addf %63, %69 : vector<8x128xf32>
      %c4 = arith.constant 4 : index
      %c0_41 = arith.constant 0 : index
      %71 = tpu.strided_load %arg3[%c4, %c0_41] {strides = array<i32: 0, 1>} : memref<27x128xf32, #tpu.memory_space<vmem>>, vector<8x128xf32>
      %72 = arith.mulf %66, %71 : vector<8x128xf32>
      %73 = arith.addf %70, %72 : vector<8x128xf32>
      %c112_i32_42 = arith.constant 112 : i32
      %74 = tpu.dynamic_rotate %66 by %c112_i32_42 dim 1 : vector<8x128xf32>, i32 -> vector<8x128xf32>
      %c5 = arith.constant 5 : index
      %c0_43 = arith.constant 0 : index
      %75 = tpu.strided_load %arg3[%c5, %c0_43] {strides = array<i32: 0, 1>} : memref<27x128xf32, #tpu.memory_space<vmem>>, vector<8x128xf32>
      %76 = arith.mulf %74, %75 : vector<8x128xf32>
      %77 = arith.addf %73, %76 : vector<8x128xf32>
      %c0_i32_44 = arith.constant 0 : i32
      %c0_i32_45 = arith.constant 0 : i32
      %78 = tpu.memref_slice %arg6[%34, %c0_i32_44, %c0_i32_45] : memref<3x10x128xf32, #tpu.memory_space<vmem>> -> memref<1x10x128xf32, #tpu.memory_space<vmem>>
      %79 = tpu.memref_squeeze %78 : memref<1x10x128xf32, #tpu.memory_space<vmem>> -> memref<10x128xf32, #tpu.memory_space<vmem>>
      %c2_46 = arith.constant 2 : index
      %c0_47 = arith.constant 0 : index
      %80 = vector.load %79[%c2_46, %c0_47] : memref<10x128xf32, #tpu.memory_space<vmem>>, vector<8x128xf32>
      %c16_i32_48 = arith.constant 16 : i32
      %81 = tpu.dynamic_rotate %80 by %c16_i32_48 dim 1 : vector<8x128xf32>, i32 -> vector<8x128xf32>
      %c6 = arith.constant 6 : index
      %c0_49 = arith.constant 0 : index
      %82 = tpu.strided_load %arg3[%c6, %c0_49] {strides = array<i32: 0, 1>} : memref<27x128xf32, #tpu.memory_space<vmem>>, vector<8x128xf32>
      %83 = arith.mulf %81, %82 : vector<8x128xf32>
      %84 = arith.addf %77, %83 : vector<8x128xf32>
      %c7 = arith.constant 7 : index
      %c0_50 = arith.constant 0 : index
      %85 = tpu.strided_load %arg3[%c7, %c0_50] {strides = array<i32: 0, 1>} : memref<27x128xf32, #tpu.memory_space<vmem>>, vector<8x128xf32>
      %86 = arith.mulf %80, %85 : vector<8x128xf32>
      %87 = arith.addf %84, %86 : vector<8x128xf32>
      %c112_i32_51 = arith.constant 112 : i32
      %88 = tpu.dynamic_rotate %80 by %c112_i32_51 dim 1 : vector<8x128xf32>, i32 -> vector<8x128xf32>
      %c8 = arith.constant 8 : index
      %c0_52 = arith.constant 0 : index
      %89 = tpu.strided_load %arg3[%c8, %c0_52] {strides = array<i32: 0, 1>} : memref<27x128xf32, #tpu.memory_space<vmem>>, vector<8x128xf32>
      %90 = arith.mulf %88, %89 : vector<8x128xf32>
      %91 = arith.addf %87, %90 : vector<8x128xf32>
      %c0_i32_53 = arith.constant 0 : i32
      %c0_i32_54 = arith.constant 0 : i32
      %92 = tpu.memref_slice %arg6[%23, %c0_i32_53, %c0_i32_54] : memref<3x10x128xf32, #tpu.memory_space<vmem>> -> memref<1x10x128xf32, #tpu.memory_space<vmem>>
      %93 = tpu.memref_squeeze %92 : memref<1x10x128xf32, #tpu.memory_space<vmem>> -> memref<10x128xf32, #tpu.memory_space<vmem>>
      %c0_55 = arith.constant 0 : index
      %c0_56 = arith.constant 0 : index
      %94 = vector.load %93[%c0_55, %c0_56] : memref<10x128xf32, #tpu.memory_space<vmem>>, vector<8x128xf32>
      %c16_i32_57 = arith.constant 16 : i32
      %95 = tpu.dynamic_rotate %94 by %c16_i32_57 dim 1 : vector<8x128xf32>, i32 -> vector<8x128xf32>
      %c9 = arith.constant 9 : index
      %c0_58 = arith.constant 0 : index
      %96 = tpu.strided_load %arg3[%c9, %c0_58] {strides = array<i32: 0, 1>} : memref<27x128xf32, #tpu.memory_space<vmem>>, vector<8x128xf32>
      %97 = arith.mulf %95, %96 : vector<8x128xf32>
      %98 = arith.addf %91, %97 : vector<8x128xf32>
      %c10 = arith.constant 10 : index
      %c0_59 = arith.constant 0 : index
      %99 = tpu.strided_load %arg3[%c10, %c0_59] {strides = array<i32: 0, 1>} : memref<27x128xf32, #tpu.memory_space<vmem>>, vector<8x128xf32>
      %100 = arith.mulf %94, %99 : vector<8x128xf32>
      %101 = arith.addf %98, %100 : vector<8x128xf32>
      %c112_i32_60 = arith.constant 112 : i32
      %102 = tpu.dynamic_rotate %94 by %c112_i32_60 dim 1 : vector<8x128xf32>, i32 -> vector<8x128xf32>
      %c11 = arith.constant 11 : index
      %c0_61 = arith.constant 0 : index
      %103 = tpu.strided_load %arg3[%c11, %c0_61] {strides = array<i32: 0, 1>} : memref<27x128xf32, #tpu.memory_space<vmem>>, vector<8x128xf32>
      %104 = arith.mulf %102, %103 : vector<8x128xf32>
      %105 = arith.addf %101, %104 : vector<8x128xf32>
      %c0_i32_62 = arith.constant 0 : i32
      %c0_i32_63 = arith.constant 0 : i32
      %106 = tpu.memref_slice %arg6[%23, %c0_i32_62, %c0_i32_63] : memref<3x10x128xf32, #tpu.memory_space<vmem>> -> memref<1x10x128xf32, #tpu.memory_space<vmem>>
      %107 = tpu.memref_squeeze %106 : memref<1x10x128xf32, #tpu.memory_space<vmem>> -> memref<10x128xf32, #tpu.memory_space<vmem>>
      %c1_64 = arith.constant 1 : index
      %c0_65 = arith.constant 0 : index
      %108 = vector.load %107[%c1_64, %c0_65] : memref<10x128xf32, #tpu.memory_space<vmem>>, vector<8x128xf32>
      %c16_i32_66 = arith.constant 16 : i32
      %109 = tpu.dynamic_rotate %108 by %c16_i32_66 dim 1 : vector<8x128xf32>, i32 -> vector<8x128xf32>
      %c12 = arith.constant 12 : index
      %c0_67 = arith.constant 0 : index
      %110 = tpu.strided_load %arg3[%c12, %c0_67] {strides = array<i32: 0, 1>} : memref<27x128xf32, #tpu.memory_space<vmem>>, vector<8x128xf32>
      %111 = arith.mulf %109, %110 : vector<8x128xf32>
      %112 = arith.addf %105, %111 : vector<8x128xf32>
      %c13 = arith.constant 13 : index
      %c0_68 = arith.constant 0 : index
      %113 = tpu.strided_load %arg3[%c13, %c0_68] {strides = array<i32: 0, 1>} : memref<27x128xf32, #tpu.memory_space<vmem>>, vector<8x128xf32>
      %114 = arith.mulf %108, %113 : vector<8x128xf32>
      %115 = arith.addf %112, %114 : vector<8x128xf32>
      %c112_i32_69 = arith.constant 112 : i32
      %116 = tpu.dynamic_rotate %108 by %c112_i32_69 dim 1 : vector<8x128xf32>, i32 -> vector<8x128xf32>
      %c14 = arith.constant 14 : index
      %c0_70 = arith.constant 0 : index
      %117 = tpu.strided_load %arg3[%c14, %c0_70] {strides = array<i32: 0, 1>} : memref<27x128xf32, #tpu.memory_space<vmem>>, vector<8x128xf32>
      %118 = arith.mulf %116, %117 : vector<8x128xf32>
      %119 = arith.addf %115, %118 : vector<8x128xf32>
      %c0_i32_71 = arith.constant 0 : i32
      %c0_i32_72 = arith.constant 0 : i32
      %120 = tpu.memref_slice %arg6[%23, %c0_i32_71, %c0_i32_72] : memref<3x10x128xf32, #tpu.memory_space<vmem>> -> memref<1x10x128xf32, #tpu.memory_space<vmem>>
      %121 = tpu.memref_squeeze %120 : memref<1x10x128xf32, #tpu.memory_space<vmem>> -> memref<10x128xf32, #tpu.memory_space<vmem>>
      %c2_73 = arith.constant 2 : index
      %c0_74 = arith.constant 0 : index
      %122 = vector.load %121[%c2_73, %c0_74] : memref<10x128xf32, #tpu.memory_space<vmem>>, vector<8x128xf32>
      %c16_i32_75 = arith.constant 16 : i32
      %123 = tpu.dynamic_rotate %122 by %c16_i32_75 dim 1 : vector<8x128xf32>, i32 -> vector<8x128xf32>
      %c15 = arith.constant 15 : index
      %c0_76 = arith.constant 0 : index
      %124 = tpu.strided_load %arg3[%c15, %c0_76] {strides = array<i32: 0, 1>} : memref<27x128xf32, #tpu.memory_space<vmem>>, vector<8x128xf32>
      %125 = arith.mulf %123, %124 : vector<8x128xf32>
      %126 = arith.addf %119, %125 : vector<8x128xf32>
      %c16 = arith.constant 16 : index
      %c0_77 = arith.constant 0 : index
      %127 = tpu.strided_load %arg3[%c16, %c0_77] {strides = array<i32: 0, 1>} : memref<27x128xf32, #tpu.memory_space<vmem>>, vector<8x128xf32>
      %128 = arith.mulf %122, %127 : vector<8x128xf32>
      %129 = arith.addf %126, %128 : vector<8x128xf32>
      %c112_i32_78 = arith.constant 112 : i32
      %130 = tpu.dynamic_rotate %122 by %c112_i32_78 dim 1 : vector<8x128xf32>, i32 -> vector<8x128xf32>
      %c17 = arith.constant 17 : index
      %c0_79 = arith.constant 0 : index
      %131 = tpu.strided_load %arg3[%c17, %c0_79] {strides = array<i32: 0, 1>} : memref<27x128xf32, #tpu.memory_space<vmem>>, vector<8x128xf32>
      %132 = arith.mulf %130, %131 : vector<8x128xf32>
      %133 = arith.addf %129, %132 : vector<8x128xf32>
      %c0_i32_80 = arith.constant 0 : i32
      %c0_i32_81 = arith.constant 0 : i32
      %134 = tpu.memref_slice %arg6[%12, %c0_i32_80, %c0_i32_81] : memref<3x10x128xf32, #tpu.memory_space<vmem>> -> memref<1x10x128xf32, #tpu.memory_space<vmem>>
      %135 = tpu.memref_squeeze %134 : memref<1x10x128xf32, #tpu.memory_space<vmem>> -> memref<10x128xf32, #tpu.memory_space<vmem>>
      %c0_82 = arith.constant 0 : index
      %c0_83 = arith.constant 0 : index
      %136 = vector.load %135[%c0_82, %c0_83] : memref<10x128xf32, #tpu.memory_space<vmem>>, vector<8x128xf32>
      %c16_i32_84 = arith.constant 16 : i32
      %137 = tpu.dynamic_rotate %136 by %c16_i32_84 dim 1 : vector<8x128xf32>, i32 -> vector<8x128xf32>
      %c18 = arith.constant 18 : index
      %c0_85 = arith.constant 0 : index
      %138 = tpu.strided_load %arg3[%c18, %c0_85] {strides = array<i32: 0, 1>} : memref<27x128xf32, #tpu.memory_space<vmem>>, vector<8x128xf32>
      %139 = arith.mulf %137, %138 : vector<8x128xf32>
      %140 = arith.addf %133, %139 : vector<8x128xf32>
      %c19 = arith.constant 19 : index
      %c0_86 = arith.constant 0 : index
      %141 = tpu.strided_load %arg3[%c19, %c0_86] {strides = array<i32: 0, 1>} : memref<27x128xf32, #tpu.memory_space<vmem>>, vector<8x128xf32>
      %142 = arith.mulf %136, %141 : vector<8x128xf32>
      %143 = arith.addf %140, %142 : vector<8x128xf32>
      %c112_i32_87 = arith.constant 112 : i32
      %144 = tpu.dynamic_rotate %136 by %c112_i32_87 dim 1 : vector<8x128xf32>, i32 -> vector<8x128xf32>
      %c20 = arith.constant 20 : index
      %c0_88 = arith.constant 0 : index
      %145 = tpu.strided_load %arg3[%c20, %c0_88] {strides = array<i32: 0, 1>} : memref<27x128xf32, #tpu.memory_space<vmem>>, vector<8x128xf32>
      %146 = arith.mulf %144, %145 : vector<8x128xf32>
      %147 = arith.addf %143, %146 : vector<8x128xf32>
      %c0_i32_89 = arith.constant 0 : i32
      %c0_i32_90 = arith.constant 0 : i32
      %148 = tpu.memref_slice %arg6[%12, %c0_i32_89, %c0_i32_90] : memref<3x10x128xf32, #tpu.memory_space<vmem>> -> memref<1x10x128xf32, #tpu.memory_space<vmem>>
      %149 = tpu.memref_squeeze %148 : memref<1x10x128xf32, #tpu.memory_space<vmem>> -> memref<10x128xf32, #tpu.memory_space<vmem>>
      %c1_91 = arith.constant 1 : index
      %c0_92 = arith.constant 0 : index
      %150 = vector.load %149[%c1_91, %c0_92] : memref<10x128xf32, #tpu.memory_space<vmem>>, vector<8x128xf32>
      %c16_i32_93 = arith.constant 16 : i32
      %151 = tpu.dynamic_rotate %150 by %c16_i32_93 dim 1 : vector<8x128xf32>, i32 -> vector<8x128xf32>
      %c21 = arith.constant 21 : index
      %c0_94 = arith.constant 0 : index
      %152 = tpu.strided_load %arg3[%c21, %c0_94] {strides = array<i32: 0, 1>} : memref<27x128xf32, #tpu.memory_space<vmem>>, vector<8x128xf32>
      %153 = arith.mulf %151, %152 : vector<8x128xf32>
      %154 = arith.addf %147, %153 : vector<8x128xf32>
      %c22 = arith.constant 22 : index
      %c0_95 = arith.constant 0 : index
      %155 = tpu.strided_load %arg3[%c22, %c0_95] {strides = array<i32: 0, 1>} : memref<27x128xf32, #tpu.memory_space<vmem>>, vector<8x128xf32>
      %156 = arith.mulf %150, %155 : vector<8x128xf32>
      %157 = arith.addf %154, %156 : vector<8x128xf32>
      %c112_i32_96 = arith.constant 112 : i32
      %158 = tpu.dynamic_rotate %150 by %c112_i32_96 dim 1 : vector<8x128xf32>, i32 -> vector<8x128xf32>
      %c23 = arith.constant 23 : index
      %c0_97 = arith.constant 0 : index
      %159 = tpu.strided_load %arg3[%c23, %c0_97] {strides = array<i32: 0, 1>} : memref<27x128xf32, #tpu.memory_space<vmem>>, vector<8x128xf32>
      %160 = arith.mulf %158, %159 : vector<8x128xf32>
      %161 = arith.addf %157, %160 : vector<8x128xf32>
      %c0_i32_98 = arith.constant 0 : i32
      %c0_i32_99 = arith.constant 0 : i32
      %162 = tpu.memref_slice %arg6[%12, %c0_i32_98, %c0_i32_99] : memref<3x10x128xf32, #tpu.memory_space<vmem>> -> memref<1x10x128xf32, #tpu.memory_space<vmem>>
      %163 = tpu.memref_squeeze %162 : memref<1x10x128xf32, #tpu.memory_space<vmem>> -> memref<10x128xf32, #tpu.memory_space<vmem>>
      %c2_100 = arith.constant 2 : index
      %c0_101 = arith.constant 0 : index
      %164 = vector.load %163[%c2_100, %c0_101] : memref<10x128xf32, #tpu.memory_space<vmem>>, vector<8x128xf32>
      %c16_i32_102 = arith.constant 16 : i32
      %165 = tpu.dynamic_rotate %164 by %c16_i32_102 dim 1 : vector<8x128xf32>, i32 -> vector<8x128xf32>
      %c24 = arith.constant 24 : index
      %c0_103 = arith.constant 0 : index
      %166 = tpu.strided_load %arg3[%c24, %c0_103] {strides = array<i32: 0, 1>} : memref<27x128xf32, #tpu.memory_space<vmem>>, vector<8x128xf32>
      %167 = arith.mulf %165, %166 : vector<8x128xf32>
      %168 = arith.addf %161, %167 : vector<8x128xf32>
      %c25 = arith.constant 25 : index
      %c0_104 = arith.constant 0 : index
      %169 = tpu.strided_load %arg3[%c25, %c0_104] {strides = array<i32: 0, 1>} : memref<27x128xf32, #tpu.memory_space<vmem>>, vector<8x128xf32>
      %170 = arith.mulf %164, %169 : vector<8x128xf32>
      %171 = arith.addf %168, %170 : vector<8x128xf32>
      %c112_i32_105 = arith.constant 112 : i32
      %172 = tpu.dynamic_rotate %164 by %c112_i32_105 dim 1 : vector<8x128xf32>, i32 -> vector<8x128xf32>
      %c26 = arith.constant 26 : index
      %c0_106 = arith.constant 0 : index
      %173 = tpu.strided_load %arg3[%c26, %c0_106] {strides = array<i32: 0, 1>} : memref<27x128xf32, #tpu.memory_space<vmem>>, vector<8x128xf32>
      %174 = arith.mulf %172, %173 : vector<8x128xf32>
      %175 = arith.addf %171, %174 : vector<8x128xf32>
      %c0_107 = arith.constant 0 : index
      %c0_108 = arith.constant 0 : index
      %c0_109 = arith.constant 0 : index
      %c0_110 = arith.constant 0 : index
      %176 = vector.load %arg5[%c0_107, %c0_108, %c0_109, %c0_110] : memref<1x1x8x128xf32, #tpu.memory_space<vmem>>, vector<1x1x8x128xf32>
      %177 = vector.shape_cast %176 : vector<1x1x8x128xf32> to vector<8x128xf32>
      %178 = vector.shape_cast %175 : vector<8x128xf32> to vector<1x1x8x128xf32>
      tpu.vector_store %arg5[%c0_107, %c0_108, %c0_109, %c0_110], %178 {strides = array<i32>} : memref<1x1x8x128xf32, #tpu.memory_space<vmem>>, vector<1x1x8x128xf32>,
    } else {
    }
    return
  }
  func.func @transform_0(%arg0: i32, %arg1: i32) -> (i32, i32, i32, i32) {
    %c3_i32 = arith.constant 3 : i32
    %0 = arith.minsi %arg1, %c3_i32 : i32
    %c0_i32 = arith.constant 0 : i32
    %c0_i32_0 = arith.constant 0 : i32
    %c0_i32_1 = arith.constant 0 : i32
    return %arg0, %0, %c0_i32, %c0_i32_0 : i32, i32, i32, i32
  }
  func.func @transform_1(%arg0: i32, %arg1: i32) -> (i32, i32) {
    %c0_i32 = arith.constant 0 : i32
    %c0_i32_0 = arith.constant 0 : i32
    %c0_i32_1 = arith.constant 0 : i32
    return %c0_i32, %c0_i32_0 : i32, i32
  }
  func.func @transform_2(%arg0: i32, %arg1: i32) -> (i32, i32) {
    %c0_i32 = arith.constant 0 : i32
    %c0_i32_0 = arith.constant 0 : i32
    %c0_i32_1 = arith.constant 0 : i32
    return %c0_i32, %c0_i32_0 : i32, i32
  }
  func.func @transform_3(%arg0: i32, %arg1: i32) -> (i32, i32, i32, i32) {
    %c1_i32 = arith.constant 1 : i32
    %0 = arith.subi %arg1, %c1_i32 : i32
    %c0_i32 = arith.constant 0 : i32
    %1 = arith.maxsi %0, %c0_i32 : i32
    %c0_i32_0 = arith.constant 0 : i32
    %c0_i32_1 = arith.constant 0 : i32
    %c0_i32_2 = arith.constant 0 : i32
    return %arg0, %1, %c0_i32_0, %c0_i32_1 : i32, i32, i32, i32
  }
}

module attributes {stable_mosaic.version = 11 : i64} {
  func.func @_peg_kernel(%arg0: i32, %arg1: i32, %arg2: memref<1x1x8x128xf32, #tpu.memory_space<vmem>>, %arg3: memref<27x128xf32, #tpu.memory_space<vmem>>, %arg4: memref<1x128xf32, #tpu.memory_space<vmem>>, %arg5: memref<1x1x8x128xf32, #tpu.memory_space<vmem>>, %arg6: memref<3x10x128xf32, #tpu.memory_space<vmem>>) attributes {dimension_semantics = [#tpu.dimension_semantics<parallel>, #tpu.dimension_semantics<arbitrary>], iteration_bounds = array<i64: 2, 5>, scalar_prefetch = 0 : i64, scratch_operands = 1 : i64, tpu.core_type = #tpu.core_type<tc>, window_params = [{transform_indices = @transform_0, window_bounds = array<i64: 1, 1, 8, 128>}, {pipeline_mode = #tpu.pipeline_mode<synchronous>, transform_indices = @transform_1, window_bounds = array<i64: 27, 128>}, {pipeline_mode = #tpu.pipeline_mode<synchronous>, transform_indices = @transform_2, window_bounds = array<i64: 1, 128>}, {transform_indices = @transform_3, window_bounds = array<i64: 1, 1, 8, 128>}]} {
    %c0_i32 = arith.constant 0 : i32
    %0 = arith.cmpi eq, %arg1, %c0_i32 : i32
    %1 = arith.extui %0 : i1 to i32
    %c0_i32_0 = arith.constant 0 : i32
    %2 = arith.cmpi ne, %1, %c0_i32_0 : i32
    scf.if %2 {
      %cst = arith.constant 0.000000e+00 : f32
      %49 = vector.broadcast %cst : f32 to vector<3x10x128xf32>
      %c0_24 = arith.constant 0 : index
      %c0_25 = arith.constant 0 : index
      %c0_26 = arith.constant 0 : index
      %50 = vector.load %arg6[%c0_24, %c0_25, %c0_26] : memref<3x10x128xf32, #tpu.memory_space<vmem>>, vector<3x10x128xf32>
      tpu.vector_store %arg6[%c0_24, %c0_25, %c0_26], %49 {strides = array<i32>} : memref<3x10x128xf32, #tpu.memory_space<vmem>>, vector<3x10x128xf32>,
    } else {
    }
    %c3_i32 = arith.constant 3 : i32
    %c0_i32_1 = arith.constant 0 : i32
    %3 = arith.cmpi eq, %c3_i32, %c0_i32_1 : i32
    %c1_i32 = arith.constant 1 : i32
    %4 = arith.select %3, %c1_i32, %c3_i32 : i32
    %5 = arith.remsi %arg1, %4 : i32
    %c0_i32_2 = arith.constant 0 : i32
    %6 = arith.cmpi ne, %5, %c0_i32_2 : i32
    %c0_i32_3 = arith.constant 0 : i32
    %7 = arith.cmpi slt, %5, %c0_i32_3 : i32
    %c0_i32_4 = arith.constant 0 : i32
    %8 = arith.cmpi slt, %4, %c0_i32_4 : i32
    %9 = arith.xori %7, %8 : i1
    %10 = arith.andi %9, %6 : i1
    %11 = arith.addi %5, %4 : i32
    %12 = arith.select %10, %11, %5 : i32
    %c2_i32 = arith.constant 2 : i32
    %13 = arith.addi %arg1, %c2_i32 : i32
    %c3_i32_5 = arith.constant 3 : i32
    %c0_i32_6 = arith.constant 0 : i32
    %14 = arith.cmpi eq, %c3_i32_5, %c0_i32_6 : i32
    %c1_i32_7 = arith.constant 1 : i32
    %15 = arith.select %14, %c1_i32_7, %c3_i32_5 : i32
    %16 = arith.remsi %13, %15 : i32
    %c0_i32_8 = arith.constant 0 : i32
    %17 = arith.cmpi ne, %16, %c0_i32_8 : i32
    %c0_i32_9 = arith.constant 0 : i32
    %18 = arith.cmpi slt, %16, %c0_i32_9 : i32
    %c0_i32_10 = arith.constant 0 : i32
    %19 = arith.cmpi slt, %15, %c0_i32_10 : i32
    %20 = arith.xori %18, %19 : i1
    %21 = arith.andi %20, %17 : i1
    %22 = arith.addi %16, %15 : i32
    %23 = arith.select %21, %22, %16 : i32
    %c1_i32_11 = arith.constant 1 : i32
    %24 = arith.addi %arg1, %c1_i32_11 : i32
    %c3_i32_12 = arith.constant 3 : i32
    %c0_i32_13 = arith.constant 0 : i32
    %25 = arith.cmpi eq, %c3_i32_12, %c0_i32_13 : i32
    %c1_i32_14 = arith.constant 1 : i32
    %26 = arith.select %25, %c1_i32_14, %c3_i32_12 : i32
    %27 = arith.remsi %24, %26 : i32
    %c0_i32_15 = arith.constant 0 : i32
    %28 = arith.cmpi ne, %27, %c0_i32_15 : i32
    %c0_i32_16 = arith.constant 0 : i32
    %29 = arith.cmpi slt, %27, %c0_i32_16 : i32
    %c0_i32_17 = arith.constant 0 : i32
    %30 = arith.cmpi slt, %26, %c0_i32_17 : i32
    %31 = arith.xori %29, %30 : i1
    %32 = arith.andi %31, %28 : i1
    %33 = arith.addi %27, %26 : i32
    %34 = arith.select %32, %33, %27 : i32
    %c0 = arith.constant 0 : index
    %c0_18 = arith.constant 0 : index
    %c0_19 = arith.constant 0 : index
    %c0_20 = arith.constant 0 : index
    %35 = vector.load %arg2[%c0, %c0_18, %c0_19, %c0_20] : memref<1x1x8x128xf32, #tpu.memory_space<vmem>>, vector<1x1x8x128xf32>
    %36 = vector.shape_cast %35 : vector<1x1x8x128xf32> to vector<8x128xf32>
    %c4_i32 = arith.constant 4 : i32
    %37 = arith.cmpi slt, %arg1, %c4_i32 : i32
    %38 = arith.extui %37 : i1 to i32
    %39 = arith.sitofp %38 : i32 to f32
    %40 = vector.broadcast %39 : f32 to vector<8x128xf32>
    %41 = arith.mulf %36, %40 : vector<8x128xf32>
    %42 = arith.index_cast %12 : i32 to index
    %c1 = arith.constant 1 : index
    %c0_21 = arith.constant 0 : index
    %43 = vector.load %arg6[%42, %c1, %c0_21] : memref<3x10x128xf32, #tpu.memory_space<vmem>>, vector<1x8x128xf32>
    %44 = vector.shape_cast %43 : vector<1x8x128xf32> to vector<8x128xf32>
    %45 = vector.shape_cast %41 : vector<8x128xf32> to vector<1x8x128xf32>
    tpu.vector_store %arg6[%42, %c1, %c0_21], %45 {strides = array<i32>} : memref<3x10x128xf32, #tpu.memory_space<vmem>>, vector<1x8x128xf32>,
    %c1_i32_22 = arith.constant 1 : i32
    %46 = arith.cmpi sge, %arg1, %c1_i32_22 : i32
    %47 = arith.extui %46 : i1 to i32
    %c0_i32_23 = arith.constant 0 : i32
    %48 = arith.cmpi ne, %47, %c0_i32_23 : i32
    scf.if %48 {
      %c0_24 = arith.constant 0 : index
      %c0_25 = arith.constant 0 : index
      %49 = vector.load %arg4[%c0_24, %c0_25] : memref<1x128xf32, #tpu.memory_space<vmem>>, vector<1x128xf32>
      %50 = vector.shape_cast %49 : vector<1x128xf32> to vector<1x128xf32>
      %51 = vector.broadcast %50 : vector<1x128xf32> to vector<8x128xf32>
      %c0_i32_26 = arith.constant 0 : i32
      %c0_i32_27 = arith.constant 0 : i32
      %52 = tpu.memref_slice %arg6[%34, %c0_i32_26, %c0_i32_27] : memref<3x10x128xf32, #tpu.memory_space<vmem>> -> memref<1x10x128xf32, #tpu.memory_space<vmem>>
      %53 = tpu.memref_squeeze %52 : memref<1x10x128xf32, #tpu.memory_space<vmem>> -> memref<10x128xf32, #tpu.memory_space<vmem>>
      %c0_28 = arith.constant 0 : index
      %c0_29 = arith.constant 0 : index
      %54 = vector.load %53[%c0_28, %c0_29] : memref<10x128xf32, #tpu.memory_space<vmem>>, vector<8x128xf32>
      %c16_i32 = arith.constant 16 : i32
      %55 = tpu.dynamic_rotate %54 by %c16_i32 dim 1 : vector<8x128xf32>, i32 -> vector<8x128xf32>
      %c0_30 = arith.constant 0 : index
      %c0_31 = arith.constant 0 : index
      %56 = vector.load %arg3[%c0_30, %c0_31] : memref<27x128xf32, #tpu.memory_space<vmem>>, vector<1x128xf32>
      %57 = vector.shape_cast %56 : vector<1x128xf32> to vector<1x128xf32>
      %58 = vector.broadcast %57 : vector<1x128xf32> to vector<8x128xf32>
      %59 = arith.mulf %55, %58 : vector<8x128xf32>
      %60 = arith.addf %51, %59 : vector<8x128xf32>
      %c1_32 = arith.constant 1 : index
      %c0_33 = arith.constant 0 : index
      %61 = vector.load %arg3[%c1_32, %c0_33] : memref<27x128xf32, #tpu.memory_space<vmem>>, vector<1x128xf32>
      %62 = vector.shape_cast %61 : vector<1x128xf32> to vector<1x128xf32>
      %63 = vector.broadcast %62 : vector<1x128xf32> to vector<8x128xf32>
      %64 = arith.mulf %54, %63 : vector<8x128xf32>
      %65 = arith.addf %60, %64 : vector<8x128xf32>
      %c112_i32 = arith.constant 112 : i32
      %66 = tpu.dynamic_rotate %54 by %c112_i32 dim 1 : vector<8x128xf32>, i32 -> vector<8x128xf32>
      %c2 = arith.constant 2 : index
      %c0_34 = arith.constant 0 : index
      %67 = vector.load %arg3[%c2, %c0_34] : memref<27x128xf32, #tpu.memory_space<vmem>>, vector<1x128xf32>
      %68 = vector.shape_cast %67 : vector<1x128xf32> to vector<1x128xf32>
      %69 = vector.broadcast %68 : vector<1x128xf32> to vector<8x128xf32>
      %70 = arith.mulf %66, %69 : vector<8x128xf32>
      %71 = arith.addf %65, %70 : vector<8x128xf32>
      %c0_i32_35 = arith.constant 0 : i32
      %c0_i32_36 = arith.constant 0 : i32
      %72 = tpu.memref_slice %arg6[%34, %c0_i32_35, %c0_i32_36] : memref<3x10x128xf32, #tpu.memory_space<vmem>> -> memref<1x10x128xf32, #tpu.memory_space<vmem>>
      %73 = tpu.memref_squeeze %72 : memref<1x10x128xf32, #tpu.memory_space<vmem>> -> memref<10x128xf32, #tpu.memory_space<vmem>>
      %c1_37 = arith.constant 1 : index
      %c0_38 = arith.constant 0 : index
      %74 = vector.load %73[%c1_37, %c0_38] : memref<10x128xf32, #tpu.memory_space<vmem>>, vector<8x128xf32>
      %c16_i32_39 = arith.constant 16 : i32
      %75 = tpu.dynamic_rotate %74 by %c16_i32_39 dim 1 : vector<8x128xf32>, i32 -> vector<8x128xf32>
      %c3 = arith.constant 3 : index
      %c0_40 = arith.constant 0 : index
      %76 = vector.load %arg3[%c3, %c0_40] : memref<27x128xf32, #tpu.memory_space<vmem>>, vector<1x128xf32>
      %77 = vector.shape_cast %76 : vector<1x128xf32> to vector<1x128xf32>
      %78 = vector.broadcast %77 : vector<1x128xf32> to vector<8x128xf32>
      %79 = arith.mulf %75, %78 : vector<8x128xf32>
      %80 = arith.addf %71, %79 : vector<8x128xf32>
      %c4 = arith.constant 4 : index
      %c0_41 = arith.constant 0 : index
      %81 = vector.load %arg3[%c4, %c0_41] : memref<27x128xf32, #tpu.memory_space<vmem>>, vector<1x128xf32>
      %82 = vector.shape_cast %81 : vector<1x128xf32> to vector<1x128xf32>
      %83 = vector.broadcast %82 : vector<1x128xf32> to vector<8x128xf32>
      %84 = arith.mulf %74, %83 : vector<8x128xf32>
      %85 = arith.addf %80, %84 : vector<8x128xf32>
      %c112_i32_42 = arith.constant 112 : i32
      %86 = tpu.dynamic_rotate %74 by %c112_i32_42 dim 1 : vector<8x128xf32>, i32 -> vector<8x128xf32>
      %c5 = arith.constant 5 : index
      %c0_43 = arith.constant 0 : index
      %87 = vector.load %arg3[%c5, %c0_43] : memref<27x128xf32, #tpu.memory_space<vmem>>, vector<1x128xf32>
      %88 = vector.shape_cast %87 : vector<1x128xf32> to vector<1x128xf32>
      %89 = vector.broadcast %88 : vector<1x128xf32> to vector<8x128xf32>
      %90 = arith.mulf %86, %89 : vector<8x128xf32>
      %91 = arith.addf %85, %90 : vector<8x128xf32>
      %c0_i32_44 = arith.constant 0 : i32
      %c0_i32_45 = arith.constant 0 : i32
      %92 = tpu.memref_slice %arg6[%34, %c0_i32_44, %c0_i32_45] : memref<3x10x128xf32, #tpu.memory_space<vmem>> -> memref<1x10x128xf32, #tpu.memory_space<vmem>>
      %93 = tpu.memref_squeeze %92 : memref<1x10x128xf32, #tpu.memory_space<vmem>> -> memref<10x128xf32, #tpu.memory_space<vmem>>
      %c2_46 = arith.constant 2 : index
      %c0_47 = arith.constant 0 : index
      %94 = vector.load %93[%c2_46, %c0_47] : memref<10x128xf32, #tpu.memory_space<vmem>>, vector<8x128xf32>
      %c16_i32_48 = arith.constant 16 : i32
      %95 = tpu.dynamic_rotate %94 by %c16_i32_48 dim 1 : vector<8x128xf32>, i32 -> vector<8x128xf32>
      %c6 = arith.constant 6 : index
      %c0_49 = arith.constant 0 : index
      %96 = vector.load %arg3[%c6, %c0_49] : memref<27x128xf32, #tpu.memory_space<vmem>>, vector<1x128xf32>
      %97 = vector.shape_cast %96 : vector<1x128xf32> to vector<1x128xf32>
      %98 = vector.broadcast %97 : vector<1x128xf32> to vector<8x128xf32>
      %99 = arith.mulf %95, %98 : vector<8x128xf32>
      %100 = arith.addf %91, %99 : vector<8x128xf32>
      %c7 = arith.constant 7 : index
      %c0_50 = arith.constant 0 : index
      %101 = vector.load %arg3[%c7, %c0_50] : memref<27x128xf32, #tpu.memory_space<vmem>>, vector<1x128xf32>
      %102 = vector.shape_cast %101 : vector<1x128xf32> to vector<1x128xf32>
      %103 = vector.broadcast %102 : vector<1x128xf32> to vector<8x128xf32>
      %104 = arith.mulf %94, %103 : vector<8x128xf32>
      %105 = arith.addf %100, %104 : vector<8x128xf32>
      %c112_i32_51 = arith.constant 112 : i32
      %106 = tpu.dynamic_rotate %94 by %c112_i32_51 dim 1 : vector<8x128xf32>, i32 -> vector<8x128xf32>
      %c8 = arith.constant 8 : index
      %c0_52 = arith.constant 0 : index
      %107 = vector.load %arg3[%c8, %c0_52] : memref<27x128xf32, #tpu.memory_space<vmem>>, vector<1x128xf32>
      %108 = vector.shape_cast %107 : vector<1x128xf32> to vector<1x128xf32>
      %109 = vector.broadcast %108 : vector<1x128xf32> to vector<8x128xf32>
      %110 = arith.mulf %106, %109 : vector<8x128xf32>
      %111 = arith.addf %105, %110 : vector<8x128xf32>
      %c0_i32_53 = arith.constant 0 : i32
      %c0_i32_54 = arith.constant 0 : i32
      %112 = tpu.memref_slice %arg6[%23, %c0_i32_53, %c0_i32_54] : memref<3x10x128xf32, #tpu.memory_space<vmem>> -> memref<1x10x128xf32, #tpu.memory_space<vmem>>
      %113 = tpu.memref_squeeze %112 : memref<1x10x128xf32, #tpu.memory_space<vmem>> -> memref<10x128xf32, #tpu.memory_space<vmem>>
      %c0_55 = arith.constant 0 : index
      %c0_56 = arith.constant 0 : index
      %114 = vector.load %113[%c0_55, %c0_56] : memref<10x128xf32, #tpu.memory_space<vmem>>, vector<8x128xf32>
      %c16_i32_57 = arith.constant 16 : i32
      %115 = tpu.dynamic_rotate %114 by %c16_i32_57 dim 1 : vector<8x128xf32>, i32 -> vector<8x128xf32>
      %c9 = arith.constant 9 : index
      %c0_58 = arith.constant 0 : index
      %116 = vector.load %arg3[%c9, %c0_58] : memref<27x128xf32, #tpu.memory_space<vmem>>, vector<1x128xf32>
      %117 = vector.shape_cast %116 : vector<1x128xf32> to vector<1x128xf32>
      %118 = vector.broadcast %117 : vector<1x128xf32> to vector<8x128xf32>
      %119 = arith.mulf %115, %118 : vector<8x128xf32>
      %120 = arith.addf %111, %119 : vector<8x128xf32>
      %c10 = arith.constant 10 : index
      %c0_59 = arith.constant 0 : index
      %121 = vector.load %arg3[%c10, %c0_59] : memref<27x128xf32, #tpu.memory_space<vmem>>, vector<1x128xf32>
      %122 = vector.shape_cast %121 : vector<1x128xf32> to vector<1x128xf32>
      %123 = vector.broadcast %122 : vector<1x128xf32> to vector<8x128xf32>
      %124 = arith.mulf %114, %123 : vector<8x128xf32>
      %125 = arith.addf %120, %124 : vector<8x128xf32>
      %c112_i32_60 = arith.constant 112 : i32
      %126 = tpu.dynamic_rotate %114 by %c112_i32_60 dim 1 : vector<8x128xf32>, i32 -> vector<8x128xf32>
      %c11 = arith.constant 11 : index
      %c0_61 = arith.constant 0 : index
      %127 = vector.load %arg3[%c11, %c0_61] : memref<27x128xf32, #tpu.memory_space<vmem>>, vector<1x128xf32>
      %128 = vector.shape_cast %127 : vector<1x128xf32> to vector<1x128xf32>
      %129 = vector.broadcast %128 : vector<1x128xf32> to vector<8x128xf32>
      %130 = arith.mulf %126, %129 : vector<8x128xf32>
      %131 = arith.addf %125, %130 : vector<8x128xf32>
      %c0_i32_62 = arith.constant 0 : i32
      %c0_i32_63 = arith.constant 0 : i32
      %132 = tpu.memref_slice %arg6[%23, %c0_i32_62, %c0_i32_63] : memref<3x10x128xf32, #tpu.memory_space<vmem>> -> memref<1x10x128xf32, #tpu.memory_space<vmem>>
      %133 = tpu.memref_squeeze %132 : memref<1x10x128xf32, #tpu.memory_space<vmem>> -> memref<10x128xf32, #tpu.memory_space<vmem>>
      %c1_64 = arith.constant 1 : index
      %c0_65 = arith.constant 0 : index
      %134 = vector.load %133[%c1_64, %c0_65] : memref<10x128xf32, #tpu.memory_space<vmem>>, vector<8x128xf32>
      %c16_i32_66 = arith.constant 16 : i32
      %135 = tpu.dynamic_rotate %134 by %c16_i32_66 dim 1 : vector<8x128xf32>, i32 -> vector<8x128xf32>
      %c12 = arith.constant 12 : index
      %c0_67 = arith.constant 0 : index
      %136 = vector.load %arg3[%c12, %c0_67] : memref<27x128xf32, #tpu.memory_space<vmem>>, vector<1x128xf32>
      %137 = vector.shape_cast %136 : vector<1x128xf32> to vector<1x128xf32>
      %138 = vector.broadcast %137 : vector<1x128xf32> to vector<8x128xf32>
      %139 = arith.mulf %135, %138 : vector<8x128xf32>
      %140 = arith.addf %131, %139 : vector<8x128xf32>
      %c13 = arith.constant 13 : index
      %c0_68 = arith.constant 0 : index
      %141 = vector.load %arg3[%c13, %c0_68] : memref<27x128xf32, #tpu.memory_space<vmem>>, vector<1x128xf32>
      %142 = vector.shape_cast %141 : vector<1x128xf32> to vector<1x128xf32>
      %143 = vector.broadcast %142 : vector<1x128xf32> to vector<8x128xf32>
      %144 = arith.mulf %134, %143 : vector<8x128xf32>
      %145 = arith.addf %140, %144 : vector<8x128xf32>
      %c112_i32_69 = arith.constant 112 : i32
      %146 = tpu.dynamic_rotate %134 by %c112_i32_69 dim 1 : vector<8x128xf32>, i32 -> vector<8x128xf32>
      %c14 = arith.constant 14 : index
      %c0_70 = arith.constant 0 : index
      %147 = vector.load %arg3[%c14, %c0_70] : memref<27x128xf32, #tpu.memory_space<vmem>>, vector<1x128xf32>
      %148 = vector.shape_cast %147 : vector<1x128xf32> to vector<1x128xf32>
      %149 = vector.broadcast %148 : vector<1x128xf32> to vector<8x128xf32>
      %150 = arith.mulf %146, %149 : vector<8x128xf32>
      %151 = arith.addf %145, %150 : vector<8x128xf32>
      %c0_i32_71 = arith.constant 0 : i32
      %c0_i32_72 = arith.constant 0 : i32
      %152 = tpu.memref_slice %arg6[%23, %c0_i32_71, %c0_i32_72] : memref<3x10x128xf32, #tpu.memory_space<vmem>> -> memref<1x10x128xf32, #tpu.memory_space<vmem>>
      %153 = tpu.memref_squeeze %152 : memref<1x10x128xf32, #tpu.memory_space<vmem>> -> memref<10x128xf32, #tpu.memory_space<vmem>>
      %c2_73 = arith.constant 2 : index
      %c0_74 = arith.constant 0 : index
      %154 = vector.load %153[%c2_73, %c0_74] : memref<10x128xf32, #tpu.memory_space<vmem>>, vector<8x128xf32>
      %c16_i32_75 = arith.constant 16 : i32
      %155 = tpu.dynamic_rotate %154 by %c16_i32_75 dim 1 : vector<8x128xf32>, i32 -> vector<8x128xf32>
      %c15 = arith.constant 15 : index
      %c0_76 = arith.constant 0 : index
      %156 = vector.load %arg3[%c15, %c0_76] : memref<27x128xf32, #tpu.memory_space<vmem>>, vector<1x128xf32>
      %157 = vector.shape_cast %156 : vector<1x128xf32> to vector<1x128xf32>
      %158 = vector.broadcast %157 : vector<1x128xf32> to vector<8x128xf32>
      %159 = arith.mulf %155, %158 : vector<8x128xf32>
      %160 = arith.addf %151, %159 : vector<8x128xf32>
      %c16 = arith.constant 16 : index
      %c0_77 = arith.constant 0 : index
      %161 = vector.load %arg3[%c16, %c0_77] : memref<27x128xf32, #tpu.memory_space<vmem>>, vector<1x128xf32>
      %162 = vector.shape_cast %161 : vector<1x128xf32> to vector<1x128xf32>
      %163 = vector.broadcast %162 : vector<1x128xf32> to vector<8x128xf32>
      %164 = arith.mulf %154, %163 : vector<8x128xf32>
      %165 = arith.addf %160, %164 : vector<8x128xf32>
      %c112_i32_78 = arith.constant 112 : i32
      %166 = tpu.dynamic_rotate %154 by %c112_i32_78 dim 1 : vector<8x128xf32>, i32 -> vector<8x128xf32>
      %c17 = arith.constant 17 : index
      %c0_79 = arith.constant 0 : index
      %167 = vector.load %arg3[%c17, %c0_79] : memref<27x128xf32, #tpu.memory_space<vmem>>, vector<1x128xf32>
      %168 = vector.shape_cast %167 : vector<1x128xf32> to vector<1x128xf32>
      %169 = vector.broadcast %168 : vector<1x128xf32> to vector<8x128xf32>
      %170 = arith.mulf %166, %169 : vector<8x128xf32>
      %171 = arith.addf %165, %170 : vector<8x128xf32>
      %c0_i32_80 = arith.constant 0 : i32
      %c0_i32_81 = arith.constant 0 : i32
      %172 = tpu.memref_slice %arg6[%12, %c0_i32_80, %c0_i32_81] : memref<3x10x128xf32, #tpu.memory_space<vmem>> -> memref<1x10x128xf32, #tpu.memory_space<vmem>>
      %173 = tpu.memref_squeeze %172 : memref<1x10x128xf32, #tpu.memory_space<vmem>> -> memref<10x128xf32, #tpu.memory_space<vmem>>
      %c0_82 = arith.constant 0 : index
      %c0_83 = arith.constant 0 : index
      %174 = vector.load %173[%c0_82, %c0_83] : memref<10x128xf32, #tpu.memory_space<vmem>>, vector<8x128xf32>
      %c16_i32_84 = arith.constant 16 : i32
      %175 = tpu.dynamic_rotate %174 by %c16_i32_84 dim 1 : vector<8x128xf32>, i32 -> vector<8x128xf32>
      %c18 = arith.constant 18 : index
      %c0_85 = arith.constant 0 : index
      %176 = vector.load %arg3[%c18, %c0_85] : memref<27x128xf32, #tpu.memory_space<vmem>>, vector<1x128xf32>
      %177 = vector.shape_cast %176 : vector<1x128xf32> to vector<1x128xf32>
      %178 = vector.broadcast %177 : vector<1x128xf32> to vector<8x128xf32>
      %179 = arith.mulf %175, %178 : vector<8x128xf32>
      %180 = arith.addf %171, %179 : vector<8x128xf32>
      %c19 = arith.constant 19 : index
      %c0_86 = arith.constant 0 : index
      %181 = vector.load %arg3[%c19, %c0_86] : memref<27x128xf32, #tpu.memory_space<vmem>>, vector<1x128xf32>
      %182 = vector.shape_cast %181 : vector<1x128xf32> to vector<1x128xf32>
      %183 = vector.broadcast %182 : vector<1x128xf32> to vector<8x128xf32>
      %184 = arith.mulf %174, %183 : vector<8x128xf32>
      %185 = arith.addf %180, %184 : vector<8x128xf32>
      %c112_i32_87 = arith.constant 112 : i32
      %186 = tpu.dynamic_rotate %174 by %c112_i32_87 dim 1 : vector<8x128xf32>, i32 -> vector<8x128xf32>
      %c20 = arith.constant 20 : index
      %c0_88 = arith.constant 0 : index
      %187 = vector.load %arg3[%c20, %c0_88] : memref<27x128xf32, #tpu.memory_space<vmem>>, vector<1x128xf32>
      %188 = vector.shape_cast %187 : vector<1x128xf32> to vector<1x128xf32>
      %189 = vector.broadcast %188 : vector<1x128xf32> to vector<8x128xf32>
      %190 = arith.mulf %186, %189 : vector<8x128xf32>
      %191 = arith.addf %185, %190 : vector<8x128xf32>
      %c0_i32_89 = arith.constant 0 : i32
      %c0_i32_90 = arith.constant 0 : i32
      %192 = tpu.memref_slice %arg6[%12, %c0_i32_89, %c0_i32_90] : memref<3x10x128xf32, #tpu.memory_space<vmem>> -> memref<1x10x128xf32, #tpu.memory_space<vmem>>
      %193 = tpu.memref_squeeze %192 : memref<1x10x128xf32, #tpu.memory_space<vmem>> -> memref<10x128xf32, #tpu.memory_space<vmem>>
      %c1_91 = arith.constant 1 : index
      %c0_92 = arith.constant 0 : index
      %194 = vector.load %193[%c1_91, %c0_92] : memref<10x128xf32, #tpu.memory_space<vmem>>, vector<8x128xf32>
      %c16_i32_93 = arith.constant 16 : i32
      %195 = tpu.dynamic_rotate %194 by %c16_i32_93 dim 1 : vector<8x128xf32>, i32 -> vector<8x128xf32>
      %c21 = arith.constant 21 : index
      %c0_94 = arith.constant 0 : index
      %196 = vector.load %arg3[%c21, %c0_94] : memref<27x128xf32, #tpu.memory_space<vmem>>, vector<1x128xf32>
      %197 = vector.shape_cast %196 : vector<1x128xf32> to vector<1x128xf32>
      %198 = vector.broadcast %197 : vector<1x128xf32> to vector<8x128xf32>
      %199 = arith.mulf %195, %198 : vector<8x128xf32>
      %200 = arith.addf %191, %199 : vector<8x128xf32>
      %c22 = arith.constant 22 : index
      %c0_95 = arith.constant 0 : index
      %201 = vector.load %arg3[%c22, %c0_95] : memref<27x128xf32, #tpu.memory_space<vmem>>, vector<1x128xf32>
      %202 = vector.shape_cast %201 : vector<1x128xf32> to vector<1x128xf32>
      %203 = vector.broadcast %202 : vector<1x128xf32> to vector<8x128xf32>
      %204 = arith.mulf %194, %203 : vector<8x128xf32>
      %205 = arith.addf %200, %204 : vector<8x128xf32>
      %c112_i32_96 = arith.constant 112 : i32
      %206 = tpu.dynamic_rotate %194 by %c112_i32_96 dim 1 : vector<8x128xf32>, i32 -> vector<8x128xf32>
      %c23 = arith.constant 23 : index
      %c0_97 = arith.constant 0 : index
      %207 = vector.load %arg3[%c23, %c0_97] : memref<27x128xf32, #tpu.memory_space<vmem>>, vector<1x128xf32>
      %208 = vector.shape_cast %207 : vector<1x128xf32> to vector<1x128xf32>
      %209 = vector.broadcast %208 : vector<1x128xf32> to vector<8x128xf32>
      %210 = arith.mulf %206, %209 : vector<8x128xf32>
      %211 = arith.addf %205, %210 : vector<8x128xf32>
      %c0_i32_98 = arith.constant 0 : i32
      %c0_i32_99 = arith.constant 0 : i32
      %212 = tpu.memref_slice %arg6[%12, %c0_i32_98, %c0_i32_99] : memref<3x10x128xf32, #tpu.memory_space<vmem>> -> memref<1x10x128xf32, #tpu.memory_space<vmem>>
      %213 = tpu.memref_squeeze %212 : memref<1x10x128xf32, #tpu.memory_space<vmem>> -> memref<10x128xf32, #tpu.memory_space<vmem>>
      %c2_100 = arith.constant 2 : index
      %c0_101 = arith.constant 0 : index
      %214 = vector.load %213[%c2_100, %c0_101] : memref<10x128xf32, #tpu.memory_space<vmem>>, vector<8x128xf32>
      %c16_i32_102 = arith.constant 16 : i32
      %215 = tpu.dynamic_rotate %214 by %c16_i32_102 dim 1 : vector<8x128xf32>, i32 -> vector<8x128xf32>
      %c24 = arith.constant 24 : index
      %c0_103 = arith.constant 0 : index
      %216 = vector.load %arg3[%c24, %c0_103] : memref<27x128xf32, #tpu.memory_space<vmem>>, vector<1x128xf32>
      %217 = vector.shape_cast %216 : vector<1x128xf32> to vector<1x128xf32>
      %218 = vector.broadcast %217 : vector<1x128xf32> to vector<8x128xf32>
      %219 = arith.mulf %215, %218 : vector<8x128xf32>
      %220 = arith.addf %211, %219 : vector<8x128xf32>
      %c25 = arith.constant 25 : index
      %c0_104 = arith.constant 0 : index
      %221 = vector.load %arg3[%c25, %c0_104] : memref<27x128xf32, #tpu.memory_space<vmem>>, vector<1x128xf32>
      %222 = vector.shape_cast %221 : vector<1x128xf32> to vector<1x128xf32>
      %223 = vector.broadcast %222 : vector<1x128xf32> to vector<8x128xf32>
      %224 = arith.mulf %214, %223 : vector<8x128xf32>
      %225 = arith.addf %220, %224 : vector<8x128xf32>
      %c112_i32_105 = arith.constant 112 : i32
      %226 = tpu.dynamic_rotate %214 by %c112_i32_105 dim 1 : vector<8x128xf32>, i32 -> vector<8x128xf32>
      %c26 = arith.constant 26 : index
      %c0_106 = arith.constant 0 : index
      %227 = vector.load %arg3[%c26, %c0_106] : memref<27x128xf32, #tpu.memory_space<vmem>>, vector<1x128xf32>
      %228 = vector.shape_cast %227 : vector<1x128xf32> to vector<1x128xf32>
      %229 = vector.broadcast %228 : vector<1x128xf32> to vector<8x128xf32>
      %230 = arith.mulf %226, %229 : vector<8x128xf32>
      %231 = arith.addf %225, %230 : vector<8x128xf32>
      %c0_107 = arith.constant 0 : index
      %c0_108 = arith.constant 0 : index
      %c0_109 = arith.constant 0 : index
      %c0_110 = arith.constant 0 : index
      %232 = vector.load %arg5[%c0_107, %c0_108, %c0_109, %c0_110] : memref<1x1x8x128xf32, #tpu.memory_space<vmem>>, vector<1x1x8x128xf32>
      %233 = vector.shape_cast %232 : vector<1x1x8x128xf32> to vector<8x128xf32>
      %234 = vector.shape_cast %231 : vector<8x128xf32> to vector<1x1x8x128xf32>
      tpu.vector_store %arg5[%c0_107, %c0_108, %c0_109, %c0_110], %234 {strides = array<i32>} : memref<1x1x8x128xf32, #tpu.memory_space<vmem>>, vector<1x1x8x128xf32>,
    } else {
    }
    return
  }
  func.func @transform_0(%arg0: i32, %arg1: i32) -> (i32, i32, i32, i32) {
    %c3_i32 = arith.constant 3 : i32
    %0 = arith.minsi %arg1, %c3_i32 : i32
    %c0_i32 = arith.constant 0 : i32
    %c0_i32_0 = arith.constant 0 : i32
    %c0_i32_1 = arith.constant 0 : i32
    return %arg0, %0, %c0_i32, %c0_i32_0 : i32, i32, i32, i32
  }
  func.func @transform_1(%arg0: i32, %arg1: i32) -> (i32, i32) {
    %c0_i32 = arith.constant 0 : i32
    %c0_i32_0 = arith.constant 0 : i32
    %c0_i32_1 = arith.constant 0 : i32
    return %c0_i32, %c0_i32_0 : i32, i32
  }
  func.func @transform_2(%arg0: i32, %arg1: i32) -> (i32, i32) {
    %c0_i32 = arith.constant 0 : i32
    %c0_i32_0 = arith.constant 0 : i32
    %c0_i32_1 = arith.constant 0 : i32
    return %c0_i32, %c0_i32_0 : i32, i32
  }
  func.func @transform_3(%arg0: i32, %arg1: i32) -> (i32, i32, i32, i32) {
    %c1_i32 = arith.constant 1 : i32
    %0 = arith.subi %arg1, %c1_i32 : i32
    %c0_i32 = arith.constant 0 : i32
    %1 = arith.maxsi %0, %c0_i32 : i32
    %c0_i32_0 = arith.constant 0 : i32
    %c0_i32_1 = arith.constant 0 : i32
    %c0_i32_2 = arith.constant 0 : i32
    return %arg0, %1, %c0_i32_0, %c0_i32_1 : i32, i32, i32, i32
  }
}

</mosaic_0001>

<llo_original>
// kernel: tpu_custom_call.1
$region0: #{tpu_custom_call.1}
  #allocation0 [shape = 'u32[]', space=smem, size = 0x4, offset = 0x4, fixed_abs, tag = 'smem constant byte address 0x4 - core index']
  #allocation1 [shape = 'u32[144,128]{1,0:T(1,128)}', space=vmem, size = 0x12000, scoped, tag = 'internal scratch']
  #allocation2 [shape = 'f32[3,10,128]{2,1,0:T(8,128)}', space=vmem, size = 0x6000, scoped, tag = 'scratch operand']
  %s0 = inlined_call_operand.hbm [shape: f32[2,4,8,128], index: 0, kind: input, shape index: {}]
  %s1 = inlined_call_operand.hbm [shape: f32[27,128], index: 1, kind: input, shape index: {}]
  %s2 = inlined_call_operand.vmem [shape: f32[1,128], index: 2, kind: input, shape index: {}]
  %s3 = inlined_call_operand.hbm [shape: f32[2,4,8,128], index: 3, kind: output, shape index: {}]
  %s4 = sld [smem:[#allocation0]]
  $region61: #{tpu_custom_call.1} parent=0
    _
  %s6 = ssub.s32 1, %s4
  %s7 = scalar_select 0, %s6, %s4
  $region1: #{tpu_custom_call.1} parent=0
    #allocation3 [shape = 'u8[8192]{0}', space=vmem, size = 0x2000, scoped, tag = 'input window, operand 0']
    #allocation4 [shape = 's32[2]{0}', space=sflag, size = 0x8, scoped, tag = 'scoped memory for tpu_custom_call.1']
    #allocation5 [shape = 's32[2]{0}', space=sflag, size = 0x8, scoped, tag = 'scoped memory for tpu_custom_call.1']
    #allocation6 [shape = 'u8[16384]{0}', space=vmem, size = 0x4000, scoped, tag = 'input window, operand 1, single buffered']
    #allocation7 [shape = 's32[1]{0}', space=sflag, size = 0x4, scoped, tag = 'scoped memory for tpu_custom_call.1']
    #allocation8 [shape = 'u8[8192]{0}', space=vmem, size = 0x2000, scoped, tag = 'output window, operand 0']
    %8 = vsyncpa [#allocation4], 0
    %s9 = scalar_lea.sflag [#allocation4], 1
    %10 = vsyncpa %s9, 0
    %11 = vsyncpa [#allocation7], 0
    %12 = vsyncpa [#allocation5], 0
    %s13 = scalar_lea.sflag [#allocation5], 1
    %14 = vsyncpa %s13, 0
    loop: start=0, step=1, limit=12
    $region2: #{tpu_custom_call.1} parent=1 // loop_pre_header
      _
    $region3: #{tpu_custom_call.1} parent=1 // loop_header
      %s16 = sphi 0, %s20
      %p17 = scmp.ge.s32.totalorder %s16, 12
      %s23 = sphi 0, %s35
      %s24 = sphi 0, %s31
      %s25 = sphi 0, %s23
      %s26 = sphi 0, %s24
      %s27 = sphi 0, %s25
      %s28 = sphi 0, %s26
      %s44 = sphi 0, %s46
      %s47 = sphi 0, %s44
      %s48 = sphi 0, %s47
      %s64 = sphi 0, %s48
      %s68 = sphi 0, %s68
      %s70 = sphi 0, %s68
      %s71 = sphi 0, %s70
      %s85 = sphi 0, %s71
      %s89 = sphi 0, %s89
      %s91 = sphi 0, %s89
      %s92 = sphi 0, %s91
      %s106 = sphi 0, %s92
      %s120 = sphi 0, %s122
      %s123 = sphi 0, %s120
      %s124 = sphi 0, %s123
      %s140 = sphi 0, %s124
    $region4: #{tpu_custom_call.1} parent=1 // loop_header_branch
      %19 = sbr.rel (%p17) target = $region8
    $region5: #{tpu_custom_call.1} parent=1 // loop_body
      %s21 = ssub.s32 %s16, 1
      %s22 = ssub.s32 %s16, 2
      %s29 = sadd.s32 1, %s24
      %p30 = scmp.ge.s32.totalorder %s29, 5
      %s31 = scalar_select %p30, 0, %s29
      %s32 = sadd.s32 1, %s23
      %s33 = scalar_select %p30, %s32, %s23
      %p34 = scmp.ge.s32.totalorder %s33, 2
      %s35 = scalar_select %p34, 0, %s33
      %p36 = scmp.lt.s32.totalorder %s24, 3
      %s37 = scalar_select %p36, %s24, 3
      %p38 = scmp.lt.s32.totalorder %s31, 3
      %s39 = scalar_select %p38, %s31, 3
      %s40 = ssub.s32 %s23, %s35
      %s41 = ssub.s32 %s37, %s39
      %s42 = sor.u32 %s40, %s41
      %p43 = scmp.eq.s32.totalorder %s42, 0
      %s45 = sadd.s32 %s44, 1
      %s46 = scalar_select %p43, %s44, %s45
      %p49 = pneg %p43
      %p50 = scmp.eq.s32.totalorder %s16, 9
      %p51 = por %p49, %p50
      %p52 = scmp.ne.s32.totalorder %s44, %s47
      %p53 = scmp.eq.s32.totalorder %s16, 0
      %p54 = por %p52, %p53
      %p55 = scmp.ne.s32.totalorder %s44, %s47
      %p56 = scmp.eq.s32.totalorder %s21, 9
      %p57 = por %p55, %p56
      %p58 = scmp.ne.s32.totalorder %s47, %s48
      %p59 = scmp.eq.s32.totalorder %s21, 0
      %p60 = por %p58, %p59
      %p61 = scmp.ne.s32.totalorder %s47, %s48
      %p62 = scmp.eq.s32.totalorder %s22, 9
      %p63 = por %p61, %p62
      %p65 = scmp.ne.s32.totalorder %s48, %s64
      %p66 = scmp.eq.s32.totalorder %s22, 0
      %p67 = por %p65, %p66
      %s69 = sadd.s32 %s68, 1
      %p72 = scmp.eq.s32.totalorder %s16, 9
      %p73 = scmp.ne.s32.totalorder %s68, %s70
      %p74 = scmp.eq.s32.totalorder %s16, 0
      %p75 = por %p73, %p74
      %p76 = scmp.ne.s32.totalorder %s68, %s70
      %p77 = scmp.eq.s32.totalorder %s21, 9
      %p78 = por %p76, %p77
      %p79 = scmp.ne.s32.totalorder %s70, %s71
      %p80 = scmp.eq.s32.totalorder %s21, 0
      %p81 = por %p79, %p80
      %p82 = scmp.ne.s32.totalorder %s70, %s71
      %p83 = scmp.eq.s32.totalorder %s22, 9
      %p84 = por %p82, %p83
      %p86 = scmp.ne.s32.totalorder %s71, %s85
      %p87 = scmp.eq.s32.totalorder %s22, 0
      %p88 = por %p86, %p87
      %s90 = sadd.s32 %s89, 1
      %p93 = scmp.eq.s32.totalorder %s16, 9
      %p94 = scmp.ne.s32.totalorder %s89, %s91
      %p95 = scmp.eq.s32.totalorder %s16, 0
      %p96 = por %p94, %p95
      %p97 = scmp.ne.s32.totalorder %s89, %s91
      %p98 = scmp.eq.s32.totalorder %s21, 9
      %p99 = por %p97, %p98
      %p100 = scmp.ne.s32.totalorder %s91, %s92
      %p101 = scmp.eq.s32.totalorder %s21, 0
      %p102 = por %p100, %p101
      %p103 = scmp.ne.s32.totalorder %s91, %s92
      %p104 = scmp.eq.s32.totalorder %s22, 9
      %p105 = por %p103, %p104
      %p107 = scmp.ne.s32.totalorder %s92, %s106
      %p108 = scmp.eq.s32.totalorder %s22, 0
      %p109 = por %p107, %p108
      %s110 = ssub.s32 %s24, 1
      %p111 = scmp.gt.s32.totalorder %s110, 0
      %s112 = scalar_select %p111, %s110, 0
      %s113 = ssub.s32 %s31, 1
      %p114 = scmp.gt.s32.totalorder %s113, 0
      %s115 = scalar_select %p114, %s113, 0
      %s116 = ssub.s32 %s23, %s35
      %s117 = ssub.s32 %s112, %s115
      %s118 = sor.u32 %s116, %s117
      %p119 = scmp.eq.s32.totalorder %s118, 0
      %s121 = sadd.s32 %s120, 1
      %s122 = scalar_select %p119, %s120, %s121
      %p125 = pneg %p119
      %p126 = scmp.eq.s32.totalorder %s16, 9
      %p127 = por %p125, %p126
      %p128 = scmp.ne.s32.totalorder %s120, %s123
      %p129 = scmp.eq.s32.totalorder %s16, 0
      %p130 = por %p128, %p129
      %p131 = scmp.ne.s32.totalorder %s120, %s123
      %p132 = scmp.eq.s32.totalorder %s21, 9
      %p133 = por %p131, %p132
      %p134 = scmp.ne.s32.totalorder %s123, %s124
      %p135 = scmp.eq.s32.totalorder %s21, 0
      %p136 = por %p134, %p135
      %p137 = scmp.ne.s32.totalorder %s123, %s124
      %p138 = scmp.eq.s32.totalorder %s22, 9
      %p139 = por %p137, %p138
      %p141 = scmp.ne.s32.totalorder %s124, %s140
      %p142 = scmp.eq.s32.totalorder %s22, 0
      %p143 = por %p141, %p142
      %p144 = scmp.le.s32.totalorder 1, %s16
      %p145 = scmp.lt.s32.totalorder %s16, 11
      %p146 = pnand %p144, %p145
      %p147 = pneg %p146
      // Predicated region
      $region9: #{tpu_custom_call.1} parent=5 // pred_check
        _
      $region10: #{tpu_custom_call.1} parent=5 // pred_check_branch
        %149 = sbr.rel (%p146) target = $region12
      $region11: #{tpu_custom_call.1} parent=5 // pred_region
        %s150 = ssub.s32 %s16, 1
        // Predicated region
        $region13: #{tpu_custom_call.1} parent=11 // pred_check
          %p151 = pneg %p81
        $region14: #{tpu_custom_call.1} parent=11 // pred_check_branch
          %153 = sbr.rel (%p151) target = $region16
        $region15: #{tpu_custom_call.1} parent=11 // pred_region
          %s155 = ssub.s32 512, 512
          %156 = vsyncadd [#allocation7], %s155
          %s157 = sshll.u32 [#allocation6], 4
          %s158 = int_to_ptr.vmem [resolvable:$true] %s157
          %163 = dma.hbm_to_vmem [thread:$0]  %s1, 512, %s158, [#allocation7], 128, 128, 8
        $region16: #{tpu_custom_call.1} parent=11 // pred_fallthru
          _
        // Predicated region
        $region17: #{tpu_custom_call.1} parent=11 // pred_check
          %p164 = pneg %p102
        $region18: #{tpu_custom_call.1} parent=11 // pred_check_branch
          %166 = sbr.rel (%p164) target = $region20
        $region19: #{tpu_custom_call.1} parent=11 // pred_region
          _
        $region20: #{tpu_custom_call.1} parent=11 // pred_fallthru
          _
      $region12: #{tpu_custom_call.1} parent=5 // pred_fallthru
        _
      %p167 = scmp.lt.s32.totalorder %s16, 10
      // Predicated region
      $region21: #{tpu_custom_call.1} parent=5 // pred_check
        %p168 = pneg %p167
      $region22: #{tpu_custom_call.1} parent=5 // pred_check_branch
        %170 = sbr.rel (%p168) target = $region24
      $region23: #{tpu_custom_call.1} parent=5 // pred_region
        // Predicated region
        $region25: #{tpu_custom_call.1} parent=23 // pred_check
          %p171 = pneg %p54
        $region26: #{tpu_custom_call.1} parent=23 // pred_check_branch
          %173 = sbr.rel (%p171) target = $region28
        $region27: #{tpu_custom_call.1} parent=23 // pred_region
          %s174 = sand.u32 %s44, 1
          %s175 = scalar_lea.sflag [#allocation4], %s174
          %s176 = sand.u32 %s44, 1
          %s177 = smul.addr %s176, 8
          %s178 = scalar_lea.vmem [#allocation3], %s177
          %p179 = scmp.lt.s32.totalorder %s24, 3
          %s180 = scalar_select %p179, %s24, 3
          %s182 = ssub.s32 128, 128
          %183 = vsyncadd %s175, %s182
          %s184 = smul.addr %s23, 4
          %s185 = sadd.s32 %s180, %s184
          %s186 = smul.addr %s185, 128
          %s187 = scalar_lea.hbm %s0, %s186
          %s189 = sshll.u32 %s178, 4
          %s190 = int_to_ptr.vmem [resolvable:$true] %s189
          %192 = dma.hbm_to_vmem [thread:$0]  %s187, 128, %s190, %s175
        $region28: #{tpu_custom_call.1} parent=23 // pred_fallthru
          _
      $region24: #{tpu_custom_call.1} parent=5 // pred_fallthru
        _
      %p193 = scmp.le.s32.totalorder 1, %s16
      %p194 = scmp.lt.s32.totalorder %s16, 11
      %p195 = pnand %p193, %p194
      %p196 = pneg %p195
      // Predicated region
      $region29: #{tpu_custom_call.1} parent=5 // pred_check
        _
      $region30: #{tpu_custom_call.1} parent=5 // pred_check_branch
        %198 = sbr.rel (%p195) target = $region32
      $region31: #{tpu_custom_call.1} parent=5 // pred_region
        %s199 = ssub.s32 %s16, 1
        %s200 = sand.u32 %s47, 1
        %s201 = scalar_lea.sflag [#allocation4], %s200
        %s202 = sand.u32 %s47, 1
        %s203 = smul.addr %s202, 8
        %s204 = scalar_lea.vmem [#allocation3], %s203
        // Predicated region
        $region33: #{tpu_custom_call.1} parent=31 // pred_check
          %p205 = pneg %p60
        $region34: #{tpu_custom_call.1} parent=31 // pred_check_branch
          %207 = sbr.rel (%p205) target = $region36
        $region35: #{tpu_custom_call.1} parent=31 // pred_region
          %208 = dma.done %s201, 128
        $region36: #{tpu_custom_call.1} parent=31 // pred_fallthru
          _
        // Predicated region
        $region37: #{tpu_custom_call.1} parent=31 // pred_check
          %p209 = pneg %p81
        $region38: #{tpu_custom_call.1} parent=31 // pred_check_branch
          %211 = sbr.rel (%p209) target = $region40
        $region39: #{tpu_custom_call.1} parent=31 // pred_region
          %212 = dma.done [#allocation7], 512
        $region40: #{tpu_custom_call.1} parent=31 // pred_fallthru
          _
        %s213 = sand.u32 %s47, 1
        %s214 = scalar_lea.sflag [#allocation4], %s213
        %s215 = sand.u32 %s47, 1
        %s216 = smul.addr %s215, 8
        %s217 = scalar_lea.vmem [#allocation3], %s216
        %p218 = pneg %p60
        %p219 = pneg %p57
        %p220 = pneg %p81
        %p221 = pneg %p78
        %p222 = pneg %p102
        %p223 = pneg %p99
        %p224 = pneg %p136
        %p225 = pneg %p133
        %s226 = sand.u32 %s123, 1
        %s227 = scalar_lea.sflag [#allocation5], %s226
        %s228 = sand.u32 %s123, 1
        %s229 = smul.addr %s228, 8
        %s230 = scalar_lea.vmem [#allocation8], %s229
        %p231 = scmp.lt.s32.totalorder %s26, 3
        %s232 = scalar_select %p231, %s26, 3
        %s233 = ssub.s32 %s26, 1
        %p234 = scmp.gt.s32.totalorder %s233, 0
        %s235 = scalar_select %p234, %s233, 0
        %p236 = scmp.eq.s32.totalorder %s26, 0
        // Predicated region
        $region41: #{tpu_custom_call.1} parent=31 // pred_check
          %p237 = pneg %p236
        $region42: #{tpu_custom_call.1} parent=31 // pred_check_branch
          %239 = sbr.rel (%p237) target = $region44
        $region43: #{tpu_custom_call.1} parent=31 // pred_region
          %240 = vst [vmem:[#allocation2] sm:$0xff] 0.0
          %241 = vst [vmem:[#allocation2 + $0x8] sm:$0x3] 0.0
          %242 = vst [vmem:[#allocation2 + $0x10] sm:$0xff] 0.0
          %243 = vst [vmem:[#allocation2 + $0x18] sm:$0x3] 0.0
          %244 = vst [vmem:[#allocation2 + $0x20] sm:$0xff] 0.0
          %245 = vst [vmem:[#allocation2 + $0x28] sm:$0x3] 0.0
        $region44: #{tpu_custom_call.1} parent=31 // pred_fallthru
          _
        %p246 = scmp.lt.s32.totalorder %s26, 0
        %s247 = ssub.s32 0, %s26
        %s248 = scalar_select %p246, %s247, %s26
        %s249 = sdiv.u32.pop %s248, 3
        %s250 = srem.u32.pop %s248, 3
        %s251 = ssub.s32 0, %s250
        %s252 = scalar_select %p246, %s251, %s250
        %p253 = scmp.ne.s32.totalorder %s252, 0
        %p254 = scmp.lt.s32.totalorder %s252, 0
        %p255 = pnand %p254, %p253
        %p256 = pneg %p255
        %s257 = sadd.s32 %s252, 3
        %s258 = scalar_select %p256, %s257, %s252
        %s259 = sadd.s32 %s26, 2
        %p260 = scmp.lt.s32.totalorder %s259, 0
        %s261 = ssub.s32 0, %s259
        %s262 = scalar_select %p260, %s261, %s259
        %s263 = sdiv.u32.pop %s262, 3
        %s264 = srem.u32.pop %s262, 3
        %s265 = ssub.s32 0, %s264
        %s266 = scalar_select %p260, %s265, %s264
        %p267 = scmp.ne.s32.totalorder %s266, 0
        %p268 = scmp.lt.s32.totalorder %s266, 0
        %p269 = pnand %p268, %p267
        %p270 = pneg %p269
        %s271 = sadd.s32 %s266, 3
        %s272 = scalar_select %p270, %s271, %s266
        %s273 = sadd.s32 %s26, 1
        %p274 = scmp.lt.s32.totalorder %s273, 0
        %s275 = ssub.s32 0, %s273
        %s276 = scalar_select %p274, %s275, %s273
        %s277 = sdiv.u32.pop %s276, 3
        %s278 = srem.u32.pop %s276, 3
        %s279 = ssub.s32 0, %s278
        %s280 = scalar_select %p274, %s279, %s278
        %p281 = scmp.ne.s32.totalorder %s280, 0
        %p282 = scmp.lt.s32.totalorder %s280, 0
        %p283 = pnand %p282, %p281
        %p284 = pneg %p283
        %s285 = sadd.s32 %s280, 3
        %s286 = scalar_select %p284, %s285, %s280
        %v287 = vld [vmem:[%s204] sm:$0xff]
        %p288 = scmp.lt.s32.totalorder %s26, 4
        %s289 = scalar_select %p288, 1, 0
        %s290 = scvt.s32.f32 %s289
        %v291 = vstv %s290
        %v292 = vmul.f32 %v287, %v291
        %s293 = smul.u32 %s258, 16
        %s294 = scalar_lea.vmem [#allocation2], %s293
        %295 = vst [vmem:[%s294 + $0x1] sm:$0xff] %v292
        %p296 = scmp.ge.s32.totalorder %s26, 1
        // Predicated region
        $region45: #{tpu_custom_call.1} parent=31 // pred_check
          %p297 = pneg %p296
        $region46: #{tpu_custom_call.1} parent=31 // pred_check_branch
          %299 = sbr.rel (%p297) target = $region48
        $region47: #{tpu_custom_call.1} parent=31 // pred_region
          %v300 = vld [vmem:[%s2] ss:$0 sm:$0xff]
          %s301 = smul.u32 %s286, 16
          %s302 = scalar_lea.vmem [#allocation2], %s301
          %v303 = vld [vmem:[%s302] sm:$0xff]
          %304 = vrot.lane.b32.xlu0 %v303, 16
          %v305 = vpop.permute.xlu0 %304
          %v306 = vld [vmem:[#allocation6] ss:$0 sm:$0xff]
          %v307 = vmul.f32 %v305, %v306
          %v308 = vadd.f32 %v300, %v307
          %v309 = vld [vmem:[#allocation6 + $0x1] ss:$0 sm:$0xff]
          %v310 = vmul.f32 %v303, %v309
          %v311 = vadd.f32 %v308, %v310
          %312 = vrot.lane.b32.xlu0 %v303, 112
          %v313 = vpop.permute.xlu0 %312
          %v314 = vld [vmem:[#allocation6 + $0x2] ss:$0 sm:$0xff]
          %v315 = vmul.f32 %v313, %v314
          %v316 = vadd.f32 %v311, %v315
          %v317 = vld [vmem:[%s302 + $0x1] sm:$0xff]
          %318 = vrot.lane.b32.xlu0 %v317, 16
          %v319 = vpop.permute.xlu0 %318
          %v320 = vld [vmem:[#allocation6 + $0x3] ss:$0 sm:$0xff]
          %v321 = vmul.f32 %v319, %v320
          %v322 = vadd.f32 %v316, %v321
          %v323 = vld [vmem:[#allocation6 + $0x4] ss:$0 sm:$0xff]
          %v324 = vmul.f32 %v317, %v323
          %v325 = vadd.f32 %v322, %v324
          %326 = vrot.lane.b32.xlu0 %v317, 112
          %v327 = vpop.permute.xlu0 %326
          %v328 = vld [vmem:[#allocation6 + $0x5] ss:$0 sm:$0xff]
          %v329 = vmul.f32 %v327, %v328
          %v330 = vadd.f32 %v325, %v329
          %v331 = vld [vmem:[%s302 + $0x2] sm:$0xff]
          %332 = vrot.lane.b32.xlu0 %v331, 16
          %v333 = vpop.permute.xlu0 %332
          %v334 = vld [vmem:[#allocation6 + $0x6] ss:$0 sm:$0xff]
          %v335 = vmul.f32 %v333, %v334
          %v336 = vadd.f32 %v330, %v335
          %v337 = vld [vmem:[#allocation6 + $0x7] ss:$0 sm:$0xff]
          %v338 = vmul.f32 %v331, %v337
          %v339 = vadd.f32 %v336, %v338
          %340 = vrot.lane.b32.xlu0 %v331, 112
          %v341 = vpop.permute.xlu0 %340
          %v342 = vld [vmem:[#allocation6 + $0x8] ss:$0 sm:$0xff]
          %v343 = vmul.f32 %v341, %v342
          %v344 = vadd.f32 %v339, %v343
          %s345 = smul.u32 %s272, 16
          %s346 = scalar_lea.vmem [#allocation2], %s345
          %v347 = vld [vmem:[%s346] sm:$0xff]
          %348 = vrot.lane.b32.xlu0 %v347, 16
          %v349 = vpop.permute.xlu0 %348
          %v350 = vld [vmem:[#allocation6 + $0x9] ss:$0 sm:$0xff]
          %v351 = vmul.f32 %v349, %v350
          %v352 = vadd.f32 %v344, %v351
          %v353 = vld [vmem:[#allocation6 + $0xa] ss:$0 sm:$0xff]
          %v354 = vmul.f32 %v347, %v353
          %v355 = vadd.f32 %v352, %v354
          %356 = vrot.lane.b32.xlu0 %v347, 112
          %v357 = vpop.permute.xlu0 %356
          %v358 = vld [vmem:[#allocation6 + $0xb] ss:$0 sm:$0xff]
          %v359 = vmul.f32 %v357, %v358
          %v360 = vadd.f32 %v355, %v359
          %v361 = vld [vmem:[%s346 + $0x1] sm:$0xff]
          %362 = vrot.lane.b32.xlu0 %v361, 16
          %v363 = vpop.permute.xlu0 %362
          %v364 = vld [vmem:[#allocation6 + $0xc] ss:$0 sm:$0xff]
          %v365 = vmul.f32 %v363, %v364
          %v366 = vadd.f32 %v360, %v365
          %v367 = vld [vmem:[#allocation6 + $0xd] ss:$0 sm:$0xff]
          %v368 = vmul.f32 %v361, %v367
          %v369 = vadd.f32 %v366, %v368
          %370 = vrot.lane.b32.xlu0 %v361, 112
          %v371 = vpop.permute.xlu0 %370
          %v372 = vld [vmem:[#allocation6 + $0xe] ss:$0 sm:$0xff]
          %v373 = vmul.f32 %v371, %v372
          %v374 = vadd.f32 %v369, %v373
          %v375 = vld [vmem:[%s346 + $0x2] sm:$0xff]
          %376 = vrot.lane.b32.xlu0 %v375, 16
          %v377 = vpop.permute.xlu0 %376
          %v378 = vld [vmem:[#allocation6 + $0xf] ss:$0 sm:$0xff]
          %v379 = vmul.f32 %v377, %v378
          %v380 = vadd.f32 %v374, %v379
          %v381 = vld [vmem:[#allocation6 + $0x10] ss:$0 sm:$0xff]
          %v382 = vmul.f32 %v375, %v381
          %v383 = vadd.f32 %v380, %v382
          %384 = vrot.lane.b32.xlu0 %v375, 112
          %v385 = vpop.permute.xlu0 %384
          %v386 = vld [vmem:[#allocation6 + $0x11] ss:$0 sm:$0xff]
          %v387 = vmul.f32 %v385, %v386
          %v388 = vadd.f32 %v383, %v387
          %v389 = vld [vmem:[%s294] sm:$0xff]
          %390 = vrot.lane.b32.xlu0 %v389, 16
          %v391 = vpop.permute.xlu0 %390
          %v392 = vld [vmem:[#allocation6 + $0x12] ss:$0 sm:$0xff]
          %v393 = vmul.f32 %v391, %v392
          %v394 = vadd.f32 %v388, %v393
          %v395 = vld [vmem:[#allocation6 + $0x13] ss:$0 sm:$0xff]
          %v396 = vmul.f32 %v389, %v395
          %v397 = vadd.f32 %v394, %v396
          %398 = vrot.lane.b32.xlu0 %v389, 112
          %v399 = vpop.permute.xlu0 %398
          %v400 = vld [vmem:[#allocation6 + $0x14] ss:$0 sm:$0xff]
          %v401 = vmul.f32 %v399, %v400
          %v402 = vadd.f32 %v397, %v401
          %v403 = vld [vmem:[%s294 + $0x1] sm:$0xff]
          %404 = vrot.lane.b32.xlu0 %v403, 16
          %v405 = vpop.permute.xlu0 %404
          %v406 = vld [vmem:[#allocation6 + $0x15] ss:$0 sm:$0xff]
          %v407 = vmul.f32 %v405, %v406
          %v408 = vadd.f32 %v402, %v407
          %v409 = vld [vmem:[#allocation6 + $0x16] ss:$0 sm:$0xff]
          %v410 = vmul.f32 %v403, %v409
          %v411 = vadd.f32 %v408, %v410
          %412 = vrot.lane.b32.xlu0 %v403, 112
          %v413 = vpop.permute.xlu0 %412
          %v414 = vld [vmem:[#allocation6 + $0x17] ss:$0 sm:$0xff]
          %v415 = vmul.f32 %v413, %v414
          %v416 = vadd.f32 %v411, %v415
          %v417 = vld [vmem:[%s294 + $0x2] sm:$0xff]
          %418 = vrot.lane.b32.xlu0 %v417, 16
          %v419 = vpop.permute.xlu0 %418
          %v420 = vld [vmem:[#allocation6 + $0x18] ss:$0 sm:$0xff]
          %v421 = vmul.f32 %v419, %v420
          %v422 = vadd.f32 %v416, %v421
          %v423 = vld [vmem:[#allocation6 + $0x19] ss:$0 sm:$0xff]
          %v424 = vmul.f32 %v417, %v423
          %v425 = vadd.f32 %v422, %v424
          %426 = vrot.lane.b32.xlu0 %v417, 112
          %v427 = vpop.permute.xlu0 %426
          %v428 = vld [vmem:[#allocation6 + $0x1a] ss:$0 sm:$0xff]
          %v429 = vmul.f32 %v427, %v428
          %v430 = vadd.f32 %v425, %v429
          %431 = vst [vmem:[%s230] sm:$0xff] %v430
        $region48: #{tpu_custom_call.1} parent=31 // pred_fallthru
          _
        %s432 = sand.u32 %s123, 1
        %s433 = scalar_lea.sflag [#allocation5], %s432
        %s434 = sand.u32 %s123, 1
        %s435 = smul.addr %s434, 8
        %s436 = scalar_lea.vmem [#allocation8], %s435
        // Predicated region
        $region49: #{tpu_custom_call.1} parent=31 // pred_check
          %p437 = pneg %p133
        $region50: #{tpu_custom_call.1} parent=31 // pred_check_branch
          %439 = sbr.rel (%p437) target = $region52
        $region51: #{tpu_custom_call.1} parent=31 // pred_region
          %s440 = ssub.s32 %s26, 1
          %p441 = scmp.gt.s32.totalorder %s440, 0
          %s442 = scalar_select %p441, %s440, 0
          %s444 = ssub.s32 128, 128
          %445 = vsyncadd %s433, %s444
          %s446 = smul.addr %s25, 4
          %s447 = sadd.s32 %s442, %s446
          %s448 = smul.addr %s447, 128
          %s449 = scalar_lea.hbm %s3, %s448
          %s451 = sshll.u32 %s436, 4
          %s452 = int_to_ptr.vmem [resolvable:$true] %s451
          %454 = dma.vmem_to_hbm [thread:$0]  %s452, 128, %s449, %s433
        $region52: #{tpu_custom_call.1} parent=31 // pred_fallthru
          _
      $region32: #{tpu_custom_call.1} parent=5 // pred_fallthru
        _
      %p455 = scmp.le.s32.totalorder 2, %s16
      // Predicated region
      $region53: #{tpu_custom_call.1} parent=5 // pred_check
        %p456 = pneg %p455
      $region54: #{tpu_custom_call.1} parent=5 // pred_check_branch
        %458 = sbr.rel (%p456) target = $region56
      $region55: #{tpu_custom_call.1} parent=5 // pred_region
        %s459 = ssub.s32 %s16, 2
        // Predicated region
        $region57: #{tpu_custom_call.1} parent=55 // pred_check
          %p460 = pneg %p139
        $region58: #{tpu_custom_call.1} parent=55 // pred_check_branch
          %462 = sbr.rel (%p460) target = $region60
        $region59: #{tpu_custom_call.1} parent=55 // pred_region
          %s463 = sand.u32 %s124, 1
          %s464 = scalar_lea.sflag [#allocation5], %s463
          %s465 = sand.u32 %s124, 1
          %s466 = smul.addr %s465, 8
          %s467 = scalar_lea.vmem [#allocation8], %s466
          %468 = dma.done %s464, 128
        $region60: #{tpu_custom_call.1} parent=55 // pred_fallthru
          _
      $region56: #{tpu_custom_call.1} parent=5 // pred_fallthru
        _
    $region6: #{tpu_custom_call.1} parent=1 // loop_footer
      %s20 = sadd.s32 1, %s16
    $region7: #{tpu_custom_call.1} parent=1 // loop_footer_branch
      %15 = sbr.rel target = $region3
    $region8: #{tpu_custom_call.1} parent=1 // loop_exit
      _
    %469 = vsyncpa [#allocation4], 1
    %s470 = scalar_lea.sflag [#allocation4], 1
    %471 = vsyncpa %s470, 1
    %472 = vsyncpa [#allocation7], 1
    %473 = vsyncpa [#allocation5], 1
    %s474 = scalar_lea.sflag [#allocation5], 1
    %475 = vsyncpa %s474, 1

// kernel: tpu_custom_call.1
$region0: #{tpu_custom_call.1}
  #allocation0 [shape = 'u32[]', space=smem, size = 0x4, offset = 0x4, fixed_abs, tag = 'smem constant byte address 0x4 - core index']
  #allocation1 [shape = 'u32[144,128]{1,0:T(1,128)}', space=vmem, size = 0x12000, scoped, tag = 'internal scratch']
  #allocation2 [shape = 'f32[3,10,128]{2,1,0:T(8,128)}', space=vmem, size = 0x6000, scoped, tag = 'scratch operand']
  %s0 = inlined_call_operand.hbm [shape: f32[2,4,8,128], index: 0, kind: input, shape index: {}]
  %s1 = inlined_call_operand.hbm [shape: f32[27,128], index: 1, kind: input, shape index: {}]
  %s2 = inlined_call_operand.vmem [shape: f32[1,128], index: 2, kind: input, shape index: {}]
  %s3 = inlined_call_operand.hbm [shape: f32[2,4,8,128], index: 3, kind: output, shape index: {}]
  %s4 = sld [smem:[#allocation0]]
  $region61: #{tpu_custom_call.1} parent=0
    _
  %s6 = ssub.s32 1, %s4
  %s7 = scalar_select 0, %s6, %s4
  $region1: #{tpu_custom_call.1} parent=0
    #allocation3 [shape = 'u8[8192]{0}', space=vmem, size = 0x2000, scoped, tag = 'input window, operand 0']
    #allocation4 [shape = 's32[2]{0}', space=sflag, size = 0x8, scoped, tag = 'scoped memory for tpu_custom_call.1']
    #allocation5 [shape = 's32[2]{0}', space=sflag, size = 0x8, scoped, tag = 'scoped memory for tpu_custom_call.1']
    #allocation6 [shape = 'u8[16384]{0}', space=vmem, size = 0x4000, scoped, tag = 'input window, operand 1, single buffered']
    #allocation7 [shape = 's32[1]{0}', space=sflag, size = 0x4, scoped, tag = 'scoped memory for tpu_custom_call.1']
    #allocation8 [shape = 'u8[8192]{0}', space=vmem, size = 0x2000, scoped, tag = 'output window, operand 0']
    %8 = vsyncpa [#allocation4], 0
    %s9 = scalar_lea.sflag [#allocation4], 1
    %10 = vsyncpa %s9, 0
    %11 = vsyncpa [#allocation7], 0
    %12 = vsyncpa [#allocation5], 0
    %s13 = scalar_lea.sflag [#allocation5], 1
    %14 = vsyncpa %s13, 0
    loop: start=0, step=1, limit=12
    $region2: #{tpu_custom_call.1} parent=1 // loop_pre_header
      _
    $region3: #{tpu_custom_call.1} parent=1 // loop_header
      %s16 = sphi 0, %s20
      %p17 = scmp.ge.s32.totalorder %s16, 12
      %s23 = sphi 0, %s35
      %s24 = sphi 0, %s31
      %s25 = sphi 0, %s23
      %s26 = sphi 0, %s24
      %s27 = sphi 0, %s25
      %s28 = sphi 0, %s26
      %s44 = sphi 0, %s46
      %s47 = sphi 0, %s44
      %s48 = sphi 0, %s47
      %s64 = sphi 0, %s48
      %s68 = sphi 0, %s68
      %s70 = sphi 0, %s68
      %s71 = sphi 0, %s70
      %s85 = sphi 0, %s71
      %s89 = sphi 0, %s89
      %s91 = sphi 0, %s89
      %s92 = sphi 0, %s91
      %s106 = sphi 0, %s92
      %s120 = sphi 0, %s122
      %s123 = sphi 0, %s120
      %s124 = sphi 0, %s123
      %s140 = sphi 0, %s124
    $region4: #{tpu_custom_call.1} parent=1 // loop_header_branch
      %19 = sbr.rel (%p17) target = $region8
    $region5: #{tpu_custom_call.1} parent=1 // loop_body
      %s21 = ssub.s32 %s16, 1
      %s22 = ssub.s32 %s16, 2
      %s29 = sadd.s32 1, %s24
      %p30 = scmp.ge.s32.totalorder %s29, 5
      %s31 = scalar_select %p30, 0, %s29
      %s32 = sadd.s32 1, %s23
      %s33 = scalar_select %p30, %s32, %s23
      %p34 = scmp.ge.s32.totalorder %s33, 2
      %s35 = scalar_select %p34, 0, %s33
      %p36 = scmp.lt.s32.totalorder %s24, 3
      %s37 = scalar_select %p36, %s24, 3
      %p38 = scmp.lt.s32.totalorder %s31, 3
      %s39 = scalar_select %p38, %s31, 3
      %s40 = ssub.s32 %s23, %s35
      %s41 = ssub.s32 %s37, %s39
      %s42 = sor.u32 %s40, %s41
      %p43 = scmp.eq.s32.totalorder %s42, 0
      %s45 = sadd.s32 %s44, 1
      %s46 = scalar_select %p43, %s44, %s45
      %p49 = pneg %p43
      %p50 = scmp.eq.s32.totalorder %s16, 9
      %p51 = por %p49, %p50
      %p52 = scmp.ne.s32.totalorder %s44, %s47
      %p53 = scmp.eq.s32.totalorder %s16, 0
      %p54 = por %p52, %p53
      %p55 = scmp.ne.s32.totalorder %s44, %s47
      %p56 = scmp.eq.s32.totalorder %s21, 9
      %p57 = por %p55, %p56
      %p58 = scmp.ne.s32.totalorder %s47, %s48
      %p59 = scmp.eq.s32.totalorder %s21, 0
      %p60 = por %p58, %p59
      %p61 = scmp.ne.s32.totalorder %s47, %s48
      %p62 = scmp.eq.s32.totalorder %s22, 9
      %p63 = por %p61, %p62
      %p65 = scmp.ne.s32.totalorder %s48, %s64
      %p66 = scmp.eq.s32.totalorder %s22, 0
      %p67 = por %p65, %p66
      %s69 = sadd.s32 %s68, 1
      %p72 = scmp.eq.s32.totalorder %s16, 9
      %p73 = scmp.ne.s32.totalorder %s68, %s70
      %p74 = scmp.eq.s32.totalorder %s16, 0
      %p75 = por %p73, %p74
      %p76 = scmp.ne.s32.totalorder %s68, %s70
      %p77 = scmp.eq.s32.totalorder %s21, 9
      %p78 = por %p76, %p77
      %p79 = scmp.ne.s32.totalorder %s70, %s71
      %p80 = scmp.eq.s32.totalorder %s21, 0
      %p81 = por %p79, %p80
      %p82 = scmp.ne.s32.totalorder %s70, %s71
      %p83 = scmp.eq.s32.totalorder %s22, 9
      %p84 = por %p82, %p83
      %p86 = scmp.ne.s32.totalorder %s71, %s85
      %p87 = scmp.eq.s32.totalorder %s22, 0
      %p88 = por %p86, %p87
      %s90 = sadd.s32 %s89, 1
      %p93 = scmp.eq.s32.totalorder %s16, 9
      %p94 = scmp.ne.s32.totalorder %s89, %s91
      %p95 = scmp.eq.s32.totalorder %s16, 0
      %p96 = por %p94, %p95
      %p97 = scmp.ne.s32.totalorder %s89, %s91
      %p98 = scmp.eq.s32.totalorder %s21, 9
      %p99 = por %p97, %p98
      %p100 = scmp.ne.s32.totalorder %s91, %s92
      %p101 = scmp.eq.s32.totalorder %s21, 0
      %p102 = por %p100, %p101
      %p103 = scmp.ne.s32.totalorder %s91, %s92
      %p104 = scmp.eq.s32.totalorder %s22, 9
      %p105 = por %p103, %p104
      %p107 = scmp.ne.s32.totalorder %s92, %s106
      %p108 = scmp.eq.s32.totalorder %s22, 0
      %p109 = por %p107, %p108
      %s110 = ssub.s32 %s24, 1
      %p111 = scmp.gt.s32.totalorder %s110, 0
      %s112 = scalar_select %p111, %s110, 0
      %s113 = ssub.s32 %s31, 1
      %p114 = scmp.gt.s32.totalorder %s113, 0
      %s115 = scalar_select %p114, %s113, 0
      %s116 = ssub.s32 %s23, %s35
      %s117 = ssub.s32 %s112, %s115
      %s118 = sor.u32 %s116, %s117
      %p119 = scmp.eq.s32.totalorder %s118, 0
      %s121 = sadd.s32 %s120, 1
      %s122 = scalar_select %p119, %s120, %s121
      %p125 = pneg %p119
      %p126 = scmp.eq.s32.totalorder %s16, 9
      %p127 = por %p125, %p126
      %p128 = scmp.ne.s32.totalorder %s120, %s123
      %p129 = scmp.eq.s32.totalorder %s16, 0
      %p130 = por %p128, %p129
      %p131 = scmp.ne.s32.totalorder %s120, %s123
      %p132 = scmp.eq.s32.totalorder %s21, 9
      %p133 = por %p131, %p132
      %p134 = scmp.ne.s32.totalorder %s123, %s124
      %p135 = scmp.eq.s32.totalorder %s21, 0
      %p136 = por %p134, %p135
      %p137 = scmp.ne.s32.totalorder %s123, %s124
      %p138 = scmp.eq.s32.totalorder %s22, 9
      %p139 = por %p137, %p138
      %p141 = scmp.ne.s32.totalorder %s124, %s140
      %p142 = scmp.eq.s32.totalorder %s22, 0
      %p143 = por %p141, %p142
      %p144 = scmp.le.s32.totalorder 1, %s16
      %p145 = scmp.lt.s32.totalorder %s16, 11
      %p146 = pnand %p144, %p145
      %p147 = pneg %p146
      // Predicated region
      $region9: #{tpu_custom_call.1} parent=5 // pred_check
        _
      $region10: #{tpu_custom_call.1} parent=5 // pred_check_branch
        %149 = sbr.rel (%p146) target = $region12
      $region11: #{tpu_custom_call.1} parent=5 // pred_region
        %s150 = ssub.s32 %s16, 1
        // Predicated region
        $region13: #{tpu_custom_call.1} parent=11 // pred_check
          %p151 = pneg %p81
        $region14: #{tpu_custom_call.1} parent=11 // pred_check_branch
          %153 = sbr.rel (%p151) target = $region16
        $region15: #{tpu_custom_call.1} parent=11 // pred_region
          %s155 = ssub.s32 512, 512
          %156 = vsyncadd [#allocation7], %s155
          %s157 = sshll.u32 [#allocation6], 4
          %s158 = int_to_ptr.vmem [resolvable:$true] %s157
          %163 = dma.hbm_to_vmem [thread:$0]  %s1, 512, %s158, [#allocation7], 128, 128, 8
        $region16: #{tpu_custom_call.1} parent=11 // pred_fallthru
          _
        // Predicated region
        $region17: #{tpu_custom_call.1} parent=11 // pred_check
          %p164 = pneg %p102
        $region18: #{tpu_custom_call.1} parent=11 // pred_check_branch
          %166 = sbr.rel (%p164) target = $region20
        $region19: #{tpu_custom_call.1} parent=11 // pred_region
          _
        $region20: #{tpu_custom_call.1} parent=11 // pred_fallthru
          _
      $region12: #{tpu_custom_call.1} parent=5 // pred_fallthru
        _
      %p167 = scmp.lt.s32.totalorder %s16, 10
      // Predicated region
      $region21: #{tpu_custom_call.1} parent=5 // pred_check
        %p168 = pneg %p167
      $region22: #{tpu_custom_call.1} parent=5 // pred_check_branch
        %170 = sbr.rel (%p168) target = $region24
      $region23: #{tpu_custom_call.1} parent=5 // pred_region
        // Predicated region
        $region25: #{tpu_custom_call.1} parent=23 // pred_check
          %p171 = pneg %p54
        $region26: #{tpu_custom_call.1} parent=23 // pred_check_branch
          %173 = sbr.rel (%p171) target = $region28
        $region27: #{tpu_custom_call.1} parent=23 // pred_region
          %s174 = sand.u32 %s44, 1
          %s175 = scalar_lea.sflag [#allocation4], %s174
          %s176 = sand.u32 %s44, 1
          %s177 = smul.addr %s176, 8
          %s178 = scalar_lea.vmem [#allocation3], %s177
          %p179 = scmp.lt.s32.totalorder %s24, 3
          %s180 = scalar_select %p179, %s24, 3
          %s182 = ssub.s32 128, 128
          %183 = vsyncadd %s175, %s182
          %s184 = smul.addr %s23, 4
          %s185 = sadd.s32 %s180, %s184
          %s186 = smul.addr %s185, 128
          %s187 = scalar_lea.hbm %s0, %s186
          %s189 = sshll.u32 %s178, 4
          %s190 = int_to_ptr.vmem [resolvable:$true] %s189
          %192 = dma.hbm_to_vmem [thread:$0]  %s187, 128, %s190, %s175
        $region28: #{tpu_custom_call.1} parent=23 // pred_fallthru
          _
      $region24: #{tpu_custom_call.1} parent=5 // pred_fallthru
        _
      %p193 = scmp.le.s32.totalorder 1, %s16
      %p194 = scmp.lt.s32.totalorder %s16, 11
      %p195 = pnand %p193, %p194
      %p196 = pneg %p195
      // Predicated region
      $region29: #{tpu_custom_call.1} parent=5 // pred_check
        _
      $region30: #{tpu_custom_call.1} parent=5 // pred_check_branch
        %198 = sbr.rel (%p195) target = $region32
      $region31: #{tpu_custom_call.1} parent=5 // pred_region
        %s199 = ssub.s32 %s16, 1
        %s200 = sand.u32 %s47, 1
        %s201 = scalar_lea.sflag [#allocation4], %s200
        %s202 = sand.u32 %s47, 1
        %s203 = smul.addr %s202, 8
        %s204 = scalar_lea.vmem [#allocation3], %s203
        // Predicated region
        $region33: #{tpu_custom_call.1} parent=31 // pred_check
          %p205 = pneg %p60
        $region34: #{tpu_custom_call.1} parent=31 // pred_check_branch
          %207 = sbr.rel (%p205) target = $region36
        $region35: #{tpu_custom_call.1} parent=31 // pred_region
          %208 = dma.done %s201, 128
        $region36: #{tpu_custom_call.1} parent=31 // pred_fallthru
          _
        // Predicated region
        $region37: #{tpu_custom_call.1} parent=31 // pred_check
          %p209 = pneg %p81
        $region38: #{tpu_custom_call.1} parent=31 // pred_check_branch
          %211 = sbr.rel (%p209) target = $region40
        $region39: #{tpu_custom_call.1} parent=31 // pred_region
          %212 = dma.done [#allocation7], 512
        $region40: #{tpu_custom_call.1} parent=31 // pred_fallthru
          _
        %s213 = sand.u32 %s47, 1
        %s214 = scalar_lea.sflag [#allocation4], %s213
        %s215 = sand.u32 %s47, 1
        %s216 = smul.addr %s215, 8
        %s217 = scalar_lea.vmem [#allocation3], %s216
        %p218 = pneg %p60
        %p219 = pneg %p57
        %p220 = pneg %p81
        %p221 = pneg %p78
        %p222 = pneg %p102
        %p223 = pneg %p99
        %p224 = pneg %p136
        %p225 = pneg %p133
        %s226 = sand.u32 %s123, 1
        %s227 = scalar_lea.sflag [#allocation5], %s226
        %s228 = sand.u32 %s123, 1
        %s229 = smul.addr %s228, 8
        %s230 = scalar_lea.vmem [#allocation8], %s229
        %p231 = scmp.lt.s32.totalorder %s26, 3
        %s232 = scalar_select %p231, %s26, 3
        %s233 = ssub.s32 %s26, 1
        %p234 = scmp.gt.s32.totalorder %s233, 0
        %s235 = scalar_select %p234, %s233, 0
        %p236 = scmp.eq.s32.totalorder %s26, 0
        // Predicated region
        $region41: #{tpu_custom_call.1} parent=31 // pred_check
          %p237 = pneg %p236
        $region42: #{tpu_custom_call.1} parent=31 // pred_check_branch
          %239 = sbr.rel (%p237) target = $region44
        $region43: #{tpu_custom_call.1} parent=31 // pred_region
          %240 = vst [vmem:[#allocation2] sm:$0xff] 0.0
          %241 = vst [vmem:[#allocation2 + $0x8] sm:$0x3] 0.0
          %242 = vst [vmem:[#allocation2 + $0x10] sm:$0xff] 0.0
          %243 = vst [vmem:[#allocation2 + $0x18] sm:$0x3] 0.0
          %244 = vst [vmem:[#allocation2 + $0x20] sm:$0xff] 0.0
          %245 = vst [vmem:[#allocation2 + $0x28] sm:$0x3] 0.0
        $region44: #{tpu_custom_call.1} parent=31 // pred_fallthru
          _
        %p246 = scmp.lt.s32.totalorder %s26, 0
        %s247 = ssub.s32 0, %s26
        %s248 = scalar_select %p246, %s247, %s26
        %s249 = sdiv.u32.pop %s248, 3
        %s250 = srem.u32.pop %s248, 3
        %s251 = ssub.s32 0, %s250
        %s252 = scalar_select %p246, %s251, %s250
        %p253 = scmp.ne.s32.totalorder %s252, 0
        %p254 = scmp.lt.s32.totalorder %s252, 0
        %p255 = pnand %p254, %p253
        %p256 = pneg %p255
        %s257 = sadd.s32 %s252, 3
        %s258 = scalar_select %p256, %s257, %s252
        %s259 = sadd.s32 %s26, 2
        %p260 = scmp.lt.s32.totalorder %s259, 0
        %s261 = ssub.s32 0, %s259
        %s262 = scalar_select %p260, %s261, %s259
        %s263 = sdiv.u32.pop %s262, 3
        %s264 = srem.u32.pop %s262, 3
        %s265 = ssub.s32 0, %s264
        %s266 = scalar_select %p260, %s265, %s264
        %p267 = scmp.ne.s32.totalorder %s266, 0
        %p268 = scmp.lt.s32.totalorder %s266, 0
        %p269 = pnand %p268, %p267
        %p270 = pneg %p269
        %s271 = sadd.s32 %s266, 3
        %s272 = scalar_select %p270, %s271, %s266
        %s273 = sadd.s32 %s26, 1
        %p274 = scmp.lt.s32.totalorder %s273, 0
        %s275 = ssub.s32 0, %s273
        %s276 = scalar_select %p274, %s275, %s273
        %s277 = sdiv.u32.pop %s276, 3
        %s278 = srem.u32.pop %s276, 3
        %s279 = ssub.s32 0, %s278
        %s280 = scalar_select %p274, %s279, %s278
        %p281 = scmp.ne.s32.totalorder %s280, 0
        %p282 = scmp.lt.s32.totalorder %s280, 0
        %p283 = pnand %p282, %p281
        %p284 = pneg %p283
        %s285 = sadd.s32 %s280, 3
        %s286 = scalar_select %p284, %s285, %s280
        %v287 = vld [vmem:[%s204] sm:$0xff]
        %p288 = scmp.lt.s32.totalorder %s26, 4
        %s289 = scalar_select %p288, 1, 0
        %s290 = scvt.s32.f32 %s289
        %v291 = vstv %s290
        %v292 = vmul.f32 %v287, %v291
        %s293 = smul.u32 %s258, 16
        %s294 = scalar_lea.vmem [#allocation2], %s293
        %295 = vst [vmem:[%s294 + $0x1] sm:$0xff] %v292
        %p296 = scmp.ge.s32.totalorder %s26, 1
        // Predicated region
        $region45: #{tpu_custom_call.1} parent=31 // pred_check
          %p297 = pneg %p296
        $region46: #{tpu_custom_call.1} parent=31 // pred_check_branch
          %299 = sbr.rel (%p297) target = $region48
        $region47: #{tpu_custom_call.1} parent=31 // pred_region
          %v300 = vld [vmem:[%s2] sm:$0x1]
          %v302 = vlaneseq
          %v303 = vshrl.u32 %v302, 7
          %v304 = vsub.s32 0, %v303
          %v305 = vrot.slane %v300, %v304
          %s307 = smul.u32 %s286, 16
          %s308 = scalar_lea.vmem [#allocation2], %s307
          %v309 = vld [vmem:[%s308] sm:$0xff]
          %310 = vrot.lane.b32.xlu0 %v309, 16
          %v311 = vpop.permute.xlu0 %310
          %v312 = vld [vmem:[#allocation6] sm:$0x1]
          %v313 = vlaneseq
          %v314 = vshrl.u32 %v313, 7
          %v315 = vsub.s32 0, %v314
          %v316 = vrot.slane %v312, %v315
          %v317 = vmul.f32 %v311, %v316
          %v318 = vadd.f32 %v305, %v317
          %v319 = vld [vmem:[#allocation6 + $0x1] sm:$0x1]
          %v320 = vlaneseq
          %v321 = vshrl.u32 %v320, 7
          %v322 = vsub.s32 0, %v321
          %v323 = vrot.slane %v319, %v322
          %v324 = vmul.f32 %v309, %v323
          %v325 = vadd.f32 %v318, %v324
          %326 = vrot.lane.b32.xlu0 %v309, 112
          %v327 = vpop.permute.xlu0 %326
          %v328 = vld [vmem:[#allocation6 + $0x2] sm:$0x1]
          %v329 = vlaneseq
          %v330 = vshrl.u32 %v329, 7
          %v331 = vsub.s32 0, %v330
          %v332 = vrot.slane %v328, %v331
          %v333 = vmul.f32 %v327, %v332
          %v334 = vadd.f32 %v325, %v333
          %v335 = vld [vmem:[%s308 + $0x1] sm:$0xff]
          %336 = vrot.lane.b32.xlu0 %v335, 16
          %v337 = vpop.permute.xlu0 %336
          %v338 = vld [vmem:[#allocation6 + $0x3] sm:$0x1]
          %v339 = vlaneseq
          %v340 = vshrl.u32 %v339, 7
          %v341 = vsub.s32 0, %v340
          %v342 = vrot.slane %v338, %v341
          %v343 = vmul.f32 %v337, %v342
          %v344 = vadd.f32 %v334, %v343
          %v345 = vld [vmem:[#allocation6 + $0x4] sm:$0x1]
          %v346 = vlaneseq
          %v347 = vshrl.u32 %v346, 7
          %v348 = vsub.s32 0, %v347
          %v349 = vrot.slane %v345, %v348
          %v350 = vmul.f32 %v335, %v349
          %v351 = vadd.f32 %v344, %v350
          %352 = vrot.lane.b32.xlu0 %v335, 112
          %v353 = vpop.permute.xlu0 %352
          %v354 = vld [vmem:[#allocation6 + $0x5] sm:$0x1]
          %v355 = vlaneseq
          %v356 = vshrl.u32 %v355, 7
          %v357 = vsub.s32 0, %v356
          %v358 = vrot.slane %v354, %v357
          %v359 = vmul.f32 %v353, %v358
          %v360 = vadd.f32 %v351, %v359
          %v361 = vld [vmem:[%s308 + $0x2] sm:$0xff]
          %362 = vrot.lane.b32.xlu0 %v361, 16
          %v363 = vpop.permute.xlu0 %362
          %v364 = vld [vmem:[#allocation6 + $0x6] sm:$0x1]
          %v365 = vlaneseq
          %v366 = vshrl.u32 %v365, 7
          %v367 = vsub.s32 0, %v366
          %v368 = vrot.slane %v364, %v367
          %v369 = vmul.f32 %v363, %v368
          %v370 = vadd.f32 %v360, %v369
          %v371 = vld [vmem:[#allocation6 + $0x7] sm:$0x1]
          %v372 = vlaneseq
          %v373 = vshrl.u32 %v372, 7
          %v374 = vsub.s32 0, %v373
          %v375 = vrot.slane %v371, %v374
          %v376 = vmul.f32 %v361, %v375
          %v377 = vadd.f32 %v370, %v376
          %378 = vrot.lane.b32.xlu0 %v361, 112
          %v379 = vpop.permute.xlu0 %378
          %v380 = vld [vmem:[#allocation6 + $0x8] sm:$0x1]
          %v381 = vlaneseq
          %v382 = vshrl.u32 %v381, 7
          %v383 = vsub.s32 0, %v382
          %v384 = vrot.slane %v380, %v383
          %v385 = vmul.f32 %v379, %v384
          %v386 = vadd.f32 %v377, %v385
          %s387 = smul.u32 %s272, 16
          %s388 = scalar_lea.vmem [#allocation2], %s387
          %v389 = vld [vmem:[%s388] sm:$0xff]
          %390 = vrot.lane.b32.xlu0 %v389, 16
          %v391 = vpop.permute.xlu0 %390
          %v392 = vld [vmem:[#allocation6 + $0x9] sm:$0x1]
          %v393 = vlaneseq
          %v394 = vshrl.u32 %v393, 7
          %v395 = vsub.s32 0, %v394
          %v396 = vrot.slane %v392, %v395
          %v397 = vmul.f32 %v391, %v396
          %v398 = vadd.f32 %v386, %v397
          %v399 = vld [vmem:[#allocation6 + $0xa] sm:$0x1]
          %v400 = vlaneseq
          %v401 = vshrl.u32 %v400, 7
          %v402 = vsub.s32 0, %v401
          %v403 = vrot.slane %v399, %v402
          %v404 = vmul.f32 %v389, %v403
          %v405 = vadd.f32 %v398, %v404
          %406 = vrot.lane.b32.xlu0 %v389, 112
          %v407 = vpop.permute.xlu0 %406
          %v408 = vld [vmem:[#allocation6 + $0xb] sm:$0x1]
          %v409 = vlaneseq
          %v410 = vshrl.u32 %v409, 7
          %v411 = vsub.s32 0, %v410
          %v412 = vrot.slane %v408, %v411
          %v413 = vmul.f32 %v407, %v412
          %v414 = vadd.f32 %v405, %v413
          %v415 = vld [vmem:[%s388 + $0x1] sm:$0xff]
          %416 = vrot.lane.b32.xlu0 %v415, 16
          %v417 = vpop.permute.xlu0 %416
          %v418 = vld [vmem:[#allocation6 + $0xc] sm:$0x1]
          %v419 = vlaneseq
          %v420 = vshrl.u32 %v419, 7
          %v421 = vsub.s32 0, %v420
          %v422 = vrot.slane %v418, %v421
          %v423 = vmul.f32 %v417, %v422
          %v424 = vadd.f32 %v414, %v423
          %v425 = vld [vmem:[#allocation6 + $0xd] sm:$0x1]
          %v426 = vlaneseq
          %v427 = vshrl.u32 %v426, 7
          %v428 = vsub.s32 0, %v427
          %v429 = vrot.slane %v425, %v428
          %v430 = vmul.f32 %v415, %v429
          %v431 = vadd.f32 %v424, %v430
          %432 = vrot.lane.b32.xlu0 %v415, 112
          %v433 = vpop.permute.xlu0 %432
          %v434 = vld [vmem:[#allocation6 + $0xe] sm:$0x1]
          %v435 = vlaneseq
          %v436 = vshrl.u32 %v435, 7
          %v437 = vsub.s32 0, %v436
          %v438 = vrot.slane %v434, %v437
          %v439 = vmul.f32 %v433, %v438
          %v440 = vadd.f32 %v431, %v439
          %v441 = vld [vmem:[%s388 + $0x2] sm:$0xff]
          %442 = vrot.lane.b32.xlu0 %v441, 16
          %v443 = vpop.permute.xlu0 %442
          %v444 = vld [vmem:[#allocation6 + $0xf] sm:$0x1]
          %v445 = vlaneseq
          %v446 = vshrl.u32 %v445, 7
          %v447 = vsub.s32 0, %v446
          %v448 = vrot.slane %v444, %v447
          %v449 = vmul.f32 %v443, %v448
          %v450 = vadd.f32 %v440, %v449
          %v451 = vld [vmem:[#allocation6 + $0x10] sm:$0x1]
          %v452 = vlaneseq
          %v453 = vshrl.u32 %v452, 7
          %v454 = vsub.s32 0, %v453
          %v455 = vrot.slane %v451, %v454
          %v456 = vmul.f32 %v441, %v455
          %v457 = vadd.f32 %v450, %v456
          %458 = vrot.lane.b32.xlu0 %v441, 112
          %v459 = vpop.permute.xlu0 %458
          %v460 = vld [vmem:[#allocation6 + $0x11] sm:$0x1]
          %v461 = vlaneseq
          %v462 = vshrl.u32 %v461, 7
          %v463 = vsub.s32 0, %v462
          %v464 = vrot.slane %v460, %v463
          %v465 = vmul.f32 %v459, %v464
          %v466 = vadd.f32 %v457, %v465
          %v467 = vld [vmem:[%s294] sm:$0xff]
          %468 = vrot.lane.b32.xlu0 %v467, 16
          %v469 = vpop.permute.xlu0 %468
          %v470 = vld [vmem:[#allocation6 + $0x12] sm:$0x1]
          %v471 = vlaneseq
          %v472 = vshrl.u32 %v471, 7
          %v473 = vsub.s32 0, %v472
          %v474 = vrot.slane %v470, %v473
          %v475 = vmul.f32 %v469, %v474
          %v476 = vadd.f32 %v466, %v475
          %v477 = vld [vmem:[#allocation6 + $0x13] sm:$0x1]
          %v478 = vlaneseq
          %v479 = vshrl.u32 %v478, 7
          %v480 = vsub.s32 0, %v479
          %v481 = vrot.slane %v477, %v480
          %v482 = vmul.f32 %v467, %v481
          %v483 = vadd.f32 %v476, %v482
          %484 = vrot.lane.b32.xlu0 %v467, 112
          %v485 = vpop.permute.xlu0 %484
          %v486 = vld [vmem:[#allocation6 + $0x14] sm:$0x1]
          %v487 = vlaneseq
          %v488 = vshrl.u32 %v487, 7
          %v489 = vsub.s32 0, %v488
          %v490 = vrot.slane %v486, %v489
          %v491 = vmul.f32 %v485, %v490
          %v492 = vadd.f32 %v483, %v491
          %v493 = vld [vmem:[%s294 + $0x1] sm:$0xff]
          %494 = vrot.lane.b32.xlu0 %v493, 16
          %v495 = vpop.permute.xlu0 %494
          %v496 = vld [vmem:[#allocation6 + $0x15] sm:$0x1]
          %v497 = vlaneseq
          %v498 = vshrl.u32 %v497, 7
          %v499 = vsub.s32 0, %v498
          %v500 = vrot.slane %v496, %v499
          %v501 = vmul.f32 %v495, %v500
          %v502 = vadd.f32 %v492, %v501
          %v503 = vld [vmem:[#allocation6 + $0x16] sm:$0x1]
          %v504 = vlaneseq
          %v505 = vshrl.u32 %v504, 7
          %v506 = vsub.s32 0, %v505
          %v507 = vrot.slane %v503, %v506
          %v508 = vmul.f32 %v493, %v507
          %v509 = vadd.f32 %v502, %v508
          %510 = vrot.lane.b32.xlu0 %v493, 112
          %v511 = vpop.permute.xlu0 %510
          %v512 = vld [vmem:[#allocation6 + $0x17] sm:$0x1]
          %v513 = vlaneseq
          %v514 = vshrl.u32 %v513, 7
          %v515 = vsub.s32 0, %v514
          %v516 = vrot.slane %v512, %v515
          %v517 = vmul.f32 %v511, %v516
          %v518 = vadd.f32 %v509, %v517
          %v519 = vld [vmem:[%s294 + $0x2] sm:$0xff]
          %520 = vrot.lane.b32.xlu0 %v519, 16
          %v521 = vpop.permute.xlu0 %520
          %v522 = vld [vmem:[#allocation6 + $0x18] sm:$0x1]
          %v523 = vlaneseq
          %v524 = vshrl.u32 %v523, 7
          %v525 = vsub.s32 0, %v524
          %v526 = vrot.slane %v522, %v525
          %v527 = vmul.f32 %v521, %v526
          %v528 = vadd.f32 %v518, %v527
          %v529 = vld [vmem:[#allocation6 + $0x19] sm:$0x1]
          %v530 = vlaneseq
          %v531 = vshrl.u32 %v530, 7
          %v532 = vsub.s32 0, %v531
          %v533 = vrot.slane %v529, %v532
          %v534 = vmul.f32 %v519, %v533
          %v535 = vadd.f32 %v528, %v534
          %536 = vrot.lane.b32.xlu0 %v519, 112
          %v537 = vpop.permute.xlu0 %536
          %v538 = vld [vmem:[#allocation6 + $0x1a] sm:$0x1]
          %v539 = vlaneseq
          %v540 = vshrl.u32 %v539, 7
          %v541 = vsub.s32 0, %v540
          %v542 = vrot.slane %v538, %v541
          %v543 = vmul.f32 %v537, %v542
          %v544 = vadd.f32 %v535, %v543
          %545 = vst [vmem:[%s230] sm:$0xff] %v544
        $region48: #{tpu_custom_call.1} parent=31 // pred_fallthru
          _
        %s546 = sand.u32 %s123, 1
        %s547 = scalar_lea.sflag [#allocation5], %s546
        %s548 = sand.u32 %s123, 1
        %s549 = smul.addr %s548, 8
        %s550 = scalar_lea.vmem [#allocation8], %s549
        // Predicated region
        $region49: #{tpu_custom_call.1} parent=31 // pred_check
          %p551 = pneg %p133
        $region50: #{tpu_custom_call.1} parent=31 // pred_check_branch
          %553 = sbr.rel (%p551) target = $region52
        $region51: #{tpu_custom_call.1} parent=31 // pred_region
          %s554 = ssub.s32 %s26, 1
          %p555 = scmp.gt.s32.totalorder %s554, 0
          %s556 = scalar_select %p555, %s554, 0
          %s558 = ssub.s32 128, 128
          %559 = vsyncadd %s547, %s558
          %s560 = smul.addr %s25, 4
          %s561 = sadd.s32 %s556, %s560
          %s562 = smul.addr %s561, 128
          %s563 = scalar_lea.hbm %s3, %s562
          %s565 = sshll.u32 %s550, 4
          %s566 = int_to_ptr.vmem [resolvable:$true] %s565
          %568 = dma.vmem_to_hbm [thread:$0]  %s566, 128, %s563, %s547
        $region52: #{tpu_custom_call.1} parent=31 // pred_fallthru
          _
      $region32: #{tpu_custom_call.1} parent=5 // pred_fallthru
        _
      %p569 = scmp.le.s32.totalorder 2, %s16
      // Predicated region
      $region53: #{tpu_custom_call.1} parent=5 // pred_check
        %p570 = pneg %p569
      $region54: #{tpu_custom_call.1} parent=5 // pred_check_branch
        %572 = sbr.rel (%p570) target = $region56
      $region55: #{tpu_custom_call.1} parent=5 // pred_region
        %s573 = ssub.s32 %s16, 2
        // Predicated region
        $region57: #{tpu_custom_call.1} parent=55 // pred_check
          %p574 = pneg %p139
        $region58: #{tpu_custom_call.1} parent=55 // pred_check_branch
          %576 = sbr.rel (%p574) target = $region60
        $region59: #{tpu_custom_call.1} parent=55 // pred_region
          %s577 = sand.u32 %s124, 1
          %s578 = scalar_lea.sflag [#allocation5], %s577
          %s579 = sand.u32 %s124, 1
          %s580 = smul.addr %s579, 8
          %s581 = scalar_lea.vmem [#allocation8], %s580
          %582 = dma.done %s578, 128
        $region60: #{tpu_custom_call.1} parent=55 // pred_fallthru
          _
      $region56: #{tpu_custom_call.1} parent=5 // pred_fallthru
        _
    $region6: #{tpu_custom_call.1} parent=1 // loop_footer
      %s20 = sadd.s32 1, %s16
    $region7: #{tpu_custom_call.1} parent=1 // loop_footer_branch
      %15 = sbr.rel target = $region3
    $region8: #{tpu_custom_call.1} parent=1 // loop_exit
      _
    %583 = vsyncpa [#allocation4], 1
    %s584 = scalar_lea.sflag [#allocation4], 1
    %585 = vsyncpa %s584, 1
    %586 = vsyncpa [#allocation7], 1
    %587 = vsyncpa [#allocation5], 1
    %s588 = scalar_lea.sflag [#allocation5], 1
    %589 = vsyncpa %s588, 1

</llo_original>
